<compile_context>
chip_gen: v7x
topology: tpu7x:2x2x1
jax: 0.10.0
libtpu: 0.0.40
codegen_flags: <defaults>
</compile_context>

<pallas_src>
import functools

import jax
import jax.numpy as jnp
from jax.experimental import pallas as pl
from jax.experimental.pallas import tpu as pltpu

T_POS = 75  # fixed by nn.Parameter(torch.zeros(len(n_classes) + 1, 75))


def _fused_kernel(wpt_ref, x_ref, *refs, head_dims, out_width):
    """All heads fused: column softmax + temporal pooling + linear + log-softmax."""
    o_ref = refs[-1]
    wb_refs = refs[:-1]                                    # (W_0, b_0, W_1, b_1, ...)

    t = wpt_ref.shape[0]
    tb = x_ref.shape[0]

    # softmax(weights_pos, dim=0) == softmax over last axis of the transposed
    # (T, K+1) table.  Computed once per grid step (tiny).
    wpt = wpt_ref[...].astype(jnp.float32)                 # (T, K+1)
    m = jnp.max(wpt, axis=-1, keepdims=True)
    e = jnp.exp(wpt - m)
    alpha = e / jnp.sum(e, axis=-1, keepdims=True)         # (T, K+1)

    # x tile; upcast so bf16 inputs still pool/accumulate in f32.
    x = x_ref[...].astype(jnp.float32)                     # (tb, T, D)

    pieces = []
    for h, _c in enumerate(head_dims):
        a_col = alpha[:, h:h + 1]                          # (T, 1), T on sublanes
        a_sum = jnp.sum(a_col, axis=0, keepdims=True)      # (1, 1)
        # Fold normalization into the (T, 1) vector.  Exact divide is kept so
        # the f32 reference check holds; pl.reciprocal(a_sum, approx=True)
        # moves it to the EUP at ~2^-12 relative error if that is acceptable.
        a_n = (a_col / a_sum).reshape(1, t, 1)             # (1, T, 1): layout no-op

        # Temporal pooling: VPU broadcast-mul + sublane reduce over T.
        pooled = jnp.sum(a_n * x, axis=1)                  # (tb, D)

        w = wb_refs[2 * h][...]                            # (D, C_h)
        b = wb_refs[2 * h + 1][...]                        # (1, C_h)
        logits = jnp.dot(pooled, w,
                         preferred_element_type=jnp.float32) + b   # (tb, C_h)

        # Stable log-softmax over the last dim.
        lm = jnp.max(logits, axis=-1, keepdims=True)
        s = logits - lm
        lse = jnp.log(jnp.sum(jnp.exp(s), axis=-1, keepdims=True))
        pieces.append(s - lse)

    csum = sum(head_dims)
    if out_width > csum:                                   # lane-dense padding
        pieces.append(jnp.zeros((tb, out_width - csum), jnp.float32))
    o_ref[...] = jnp.concatenate(pieces, axis=-1)          # one full (unmasked) store


def multi_temporal_classifier(x, weights_pos, linears, *, batch_tile=8):
    """x: (B, 75, D).  weights_pos: (K+1, 75).  linears: list of (W (D, C_i), b (1, C_i))."""
    B, T, D = x.shape
    n_heads = len(linears)
    assert weights_pos.shape == (n_heads + 1, T)

    head_dims = tuple(int(w.shape[1]) for w, _ in linears)
    csum = sum(head_dims)
    out_width = ((csum + 127) // 128) * 128                # lane-dense output slab

    # Batch tile: whole batch if small, otherwise a multiple of 8 sublanes.
    # For realistic B*T*D, size tb so 2 * tb*T*D*4 bytes fits comfortably in
    # scoped VMEM (v7x has only 64 MiB per core) and raise vmem_limit_bytes.
    if batch_tile >= B:
        tb = B
    else:
        tb = max(8, (batch_tile // 8) * 8)
    b_pad = ((B + tb - 1) // tb) * tb
    if b_pad != B:
        x = jnp.concatenate([x, jnp.zeros((b_pad - B, T, D), x.dtype)], axis=0)
    grid = (b_pad // tb,)

    # Transposed pooling weights: softmax reduces over lanes and each head's
    # alpha column lands on sublanes, matching x's T-axis layout.
    wpt = jnp.transpose(weights_pos)                       # (T, K+1)

    in_specs = [
        pl.BlockSpec((T, n_heads + 1), lambda i: (0, 0)),
        pl.BlockSpec((tb, T, D), lambda i: (i, 0, 0)),
    ]
    args = [wpt, x]
    for w, b in linears:
        c = int(w.shape[1])
        in_specs.append(pl.BlockSpec((D, c), lambda i: (0, 0)))
        in_specs.append(pl.BlockSpec((1, c), lambda i: (0, 0)))
        args.append(w)
        args.append(b.reshape(1, c))

    kern = functools.partial(_fused_kernel, head_dims=head_dims,
                             out_width=out_width)
    packed = pl.pallas_call(
        kern,
        grid=grid,
        in_specs=in_specs,
        out_specs=pl.BlockSpec((tb, out_width), lambda i: (i, 0)),
        out_shape=jax.ShapeDtypeStruct((b_pad, out_width), jnp.float32),
        compiler_params=pltpu.CompilerParams(
            dimension_semantics=("parallel",),
        ),
    )(*args)

    # Slice the lane-dense slab back into the per-head list (matches PyTorch).
    outs = []
    off = 0
    for c in head_dims:
        outs.append(packed[:B, off:off + c])
        off += c
    return outs


def _reference(x, weights_pos, linears):
    alpha = jax.nn.softmax(weights_pos, axis=0)
    refs = []
    for i, (w, b) in enumerate(linears):
        a = alpha[i]
        pooled = jnp.sum(a[None, :, None] * x, axis=1) / jnp.sum(a)
        logits = pooled @ w + b
        refs.append(jax.nn.log_softmax(logits, axis=-1))
    return refs


if __name__ == "__main__":
    key = jax.random.PRNGKey(0)
    B, D = 16, 32
    n_classes = [10, 16]
    T = T_POS

    k1, k2, k3, k4 = jax.random.split(key, 4)
    x = jax.random.normal(k1, (B, T, D), jnp.float32)
    # weights_pos: torch.zeros(len(n_classes)+1, 75); small random values so
    # the softmax pooling weights are non-trivial.
    weights_pos = 0.1 * jax.random.normal(k2, (len(n_classes) + 1, T), jnp.float32)

    linears = []
    wkeys = jax.random.split(k3, len(n_classes))
    bkeys = jax.random.split(k4, len(n_classes))
    for c, wk, bk in zip(n_classes, wkeys, bkeys):
        w = jax.random.normal(wk, (D, c), jnp.float32) / jnp.sqrt(D)  # == torch Linear weight.T
        b = 0.01 * jax.random.normal(bk, (1, c), jnp.float32)
        linears.append((w, b))

    outs = multi_temporal_classifier(x, weights_pos, linears, batch_tile=8)
    outs = [jax.block_until_ready(o) for o in outs]

    refs = _reference(x, weights_pos, linears)
    for o, r in zip(outs, refs):
        assert o.shape == r.shape and o.dtype == jnp.float32
        assert jnp.allclose(o, r, atol=1e-5, rtol=1e-5), "mismatch vs JAX reference"

    print("KERNEL_OK")
</pallas_src>

<mosaic_0001>
module attributes {stable_mosaic.version = 11 : i64} {
  func.func @_fused_kernel(%arg0: i32, %arg1: memref<75x3xf32, #tpu.memory_space<vmem>>, %arg2: memref<8x75x32xf32, #tpu.memory_space<vmem>>, %arg3: memref<32x10xf32, #tpu.memory_space<vmem>>, %arg4: memref<1x10xf32, #tpu.memory_space<vmem>>, %arg5: memref<32x16xf32, #tpu.memory_space<vmem>>, %arg6: memref<1x16xf32, #tpu.memory_space<vmem>>, %arg7: memref<8x128xf32, #tpu.memory_space<vmem>>) attributes {dimension_semantics = [#tpu.dimension_semantics<parallel>], iteration_bounds = array<i64: 2>, scalar_prefetch = 0 : i64, scratch_operands = 0 : i64, tpu.core_type = #tpu.core_type<tc>, window_params = [{pipeline_mode = #tpu.pipeline_mode<synchronous>, transform_indices = @transform_0, window_bounds = array<i64: 75, 3>}, {transform_indices = @transform_1, window_bounds = array<i64: 8, 75, 32>}, {pipeline_mode = #tpu.pipeline_mode<synchronous>, transform_indices = @transform_2, window_bounds = array<i64: 32, 10>}, {pipeline_mode = #tpu.pipeline_mode<synchronous>, transform_indices = @transform_3, window_bounds = array<i64: 1, 10>}, {pipeline_mode = #tpu.pipeline_mode<synchronous>, transform_indices = @transform_4, window_bounds = array<i64: 32, 16>}, {pipeline_mode = #tpu.pipeline_mode<synchronous>, transform_indices = @transform_5, window_bounds = array<i64: 1, 16>}, {transform_indices = @transform_6, window_bounds = array<i64: 8, 128>}]} {
    %c0 = arith.constant 0 : index
    %c0_0 = arith.constant 0 : index
    %0 = vector.load %arg1[%c0, %c0_0] : memref<75x3xf32, #tpu.memory_space<vmem>>, vector<75x3xf32>
    %cst = arith.constant dense<0xFF800000> : vector<75xf32>
    %1 = vector.multi_reduction <maximumf>, %0, %cst [1] : vector<75x3xf32> to vector<75xf32>
    %2 = vector.shape_cast %1 : vector<75xf32> to vector<75x1xf32>
    %3 = vector.broadcast %2 : vector<75x1xf32> to vector<75x3xf32>
    %4 = arith.subf %0, %3 : vector<75x3xf32>
    %5 = math.exp %4 : vector<75x3xf32>
    %cst_1 = arith.constant dense<0.000000e+00> : vector<75xf32>
    %6 = vector.multi_reduction <add>, %5, %cst_1 [1] : vector<75x3xf32> to vector<75xf32>
    %7 = vector.shape_cast %6 : vector<75xf32> to vector<75x1xf32>
    %8 = vector.broadcast %7 : vector<75x1xf32> to vector<75x3xf32>
    %9 = arith.divf %5, %8 : vector<75x3xf32>
    %c0_2 = arith.constant 0 : index
    %c0_3 = arith.constant 0 : index
    %c0_4 = arith.constant 0 : index
    %10 = vector.load %arg2[%c0_2, %c0_3, %c0_4] : memref<8x75x32xf32, #tpu.memory_space<vmem>>, vector<8x75x32xf32>
    %11 = vector.extract_strided_slice %9 {offsets = [0, 0], sizes = [75, 1], strides = [1, 1]} : vector<75x3xf32> to vector<75x1xf32>
    %cst_5 = arith.constant dense<0.000000e+00> : vector<1xf32>
    %12 = vector.multi_reduction <add>, %11, %cst_5 [0] : vector<75x1xf32> to vector<1xf32>
    %13 = vector.shape_cast %12 : vector<1xf32> to vector<1x1xf32>
    %14 = vector.broadcast %13 : vector<1x1xf32> to vector<75x1xf32>
    %15 = arith.divf %11, %14 : vector<75x1xf32>
    %16 = vector.shape_cast %15 : vector<75x1xf32> to vector<1x75x1xf32>
    %17 = vector.broadcast %16 : vector<1x75x1xf32> to vector<8x75x32xf32>
    %18 = arith.mulf %17, %10 : vector<8x75x32xf32>
    %cst_6 = arith.constant dense<0.000000e+00> : vector<8x32xf32>
    %19 = vector.multi_reduction <add>, %18, %cst_6 [1] : vector<8x75x32xf32> to vector<8x32xf32>
    %c0_7 = arith.constant 0 : index
    %c0_8 = arith.constant 0 : index
    %20 = vector.load %arg3[%c0_7, %c0_8] : memref<32x10xf32, #tpu.memory_space<vmem>>, vector<32x10xf32>
    %c0_9 = arith.constant 0 : index
    %c0_10 = arith.constant 0 : index
    %21 = vector.load %arg4[%c0_9, %c0_10] : memref<1x10xf32, #tpu.memory_space<vmem>>, vector<1x10xf32>
    %cst_11 = arith.constant dense<0.000000e+00> : vector<8x10xf32>
    %22 = tpu.matmul %19, %20, %cst_11 {dimension_numbers = #tpu.dot_dimension_numbers<[1], [0], [0], [1], [0, 0, 1, 1], [], []>} : vector<8x32xf32>, vector<32x10xf32>, vector<8x10xf32> -> vector<8x10xf32>
    %23 = vector.broadcast %21 : vector<1x10xf32> to vector<8x10xf32>
    %24 = arith.addf %22, %23 : vector<8x10xf32>
    %cst_12 = arith.constant dense<0xFF800000> : vector<8xf32>
    %25 = vector.multi_reduction <maximumf>, %24, %cst_12 [1] : vector<8x10xf32> to vector<8xf32>
    %26 = vector.shape_cast %25 : vector<8xf32> to vector<8x1xf32>
    %27 = vector.broadcast %26 : vector<8x1xf32> to vector<8x10xf32>
    %28 = arith.subf %24, %27 : vector<8x10xf32>
    %29 = math.exp %28 : vector<8x10xf32>
    %cst_13 = arith.constant dense<0.000000e+00> : vector<8xf32>
    %30 = vector.multi_reduction <add>, %29, %cst_13 [1] : vector<8x10xf32> to vector<8xf32>
    %31 = vector.shape_cast %30 : vector<8xf32> to vector<8x1xf32>
    %32 = math.log %31 : vector<8x1xf32>
    %33 = vector.broadcast %32 : vector<8x1xf32> to vector<8x10xf32>
    %34 = arith.subf %28, %33 : vector<8x10xf32>
    %35 = vector.extract_strided_slice %9 {offsets = [0, 1], sizes = [75, 1], strides = [1, 1]} : vector<75x3xf32> to vector<75x1xf32>
    %cst_14 = arith.constant dense<0.000000e+00> : vector<1xf32>
    %36 = vector.multi_reduction <add>, %35, %cst_14 [0] : vector<75x1xf32> to vector<1xf32>
    %37 = vector.shape_cast %36 : vector<1xf32> to vector<1x1xf32>
    %38 = vector.broadcast %37 : vector<1x1xf32> to vector<75x1xf32>
    %39 = arith.divf %35, %38 : vector<75x1xf32>
    %40 = vector.shape_cast %39 : vector<75x1xf32> to vector<1x75x1xf32>
    %41 = vector.broadcast %40 : vector<1x75x1xf32> to vector<8x75x32xf32>
    %42 = arith.mulf %41, %10 : vector<8x75x32xf32>
    %cst_15 = arith.constant dense<0.000000e+00> : vector<8x32xf32>
    %43 = vector.multi_reduction <add>, %42, %cst_15 [1] : vector<8x75x32xf32> to vector<8x32xf32>
    %c0_16 = arith.constant 0 : index
    %c0_17 = arith.constant 0 : index
    %44 = vector.load %arg5[%c0_16, %c0_17] : memref<32x16xf32, #tpu.memory_space<vmem>>, vector<32x16xf32>
    %c0_18 = arith.constant 0 : index
    %c0_19 = arith.constant 0 : index
    %45 = vector.load %arg6[%c0_18, %c0_19] : memref<1x16xf32, #tpu.memory_space<vmem>>, vector<1x16xf32>
    %cst_20 = arith.constant dense<0.000000e+00> : vector<8x16xf32>
    %46 = tpu.matmul %43, %44, %cst_20 {dimension_numbers = #tpu.dot_dimension_numbers<[1], [0], [0], [1], [0, 0, 1, 1], [], []>} : vector<8x32xf32>, vector<32x16xf32>, vector<8x16xf32> -> vector<8x16xf32>
    %47 = vector.broadcast %45 : vector<1x16xf32> to vector<8x16xf32>
    %48 = arith.addf %46, %47 : vector<8x16xf32>
    %cst_21 = arith.constant dense<0xFF800000> : vector<8xf32>
    %49 = vector.multi_reduction <maximumf>, %48, %cst_21 [1] : vector<8x16xf32> to vector<8xf32>
    %50 = vector.shape_cast %49 : vector<8xf32> to vector<8x1xf32>
    %51 = vector.broadcast %50 : vector<8x1xf32> to vector<8x16xf32>
    %52 = arith.subf %48, %51 : vector<8x16xf32>
    %53 = math.exp %52 : vector<8x16xf32>
    %cst_22 = arith.constant dense<0.000000e+00> : vector<8xf32>
    %54 = vector.multi_reduction <add>, %53, %cst_22 [1] : vector<8x16xf32> to vector<8xf32>
    %55 = vector.shape_cast %54 : vector<8xf32> to vector<8x1xf32>
    %56 = math.log %55 : vector<8x1xf32>
    %57 = vector.broadcast %56 : vector<8x1xf32> to vector<8x16xf32>
    %58 = arith.subf %52, %57 : vector<8x16xf32>
    %cst_23 = arith.constant 0.000000e+00 : f32
    %59 = vector.broadcast %cst_23 : f32 to vector<8x102xf32>
    %60 = tpu.concatenate %34, %58, %59 in 1 : vector<8x10xf32>, vector<8x16xf32>, vector<8x102xf32> -> vector<8x128xf32>
    %c0_24 = arith.constant 0 : index
    %c0_25 = arith.constant 0 : index
    %61 = vector.load %arg7[%c0_24, %c0_25] : memref<8x128xf32, #tpu.memory_space<vmem>>, vector<8x128xf32>
    tpu.vector_store %arg7[%c0_24, %c0_25], %60 {strides = array<i32>} : memref<8x128xf32, #tpu.memory_space<vmem>>, vector<8x128xf32>,
    return
  }
  func.func @transform_0(%arg0: i32) -> (i32, i32) {
    %c0_i32 = arith.constant 0 : i32
    %c0_i32_0 = arith.constant 0 : i32
    %c0_i32_1 = arith.constant 0 : i32
    return %c0_i32, %c0_i32_0 : i32, i32
  }
  func.func @transform_1(%arg0: i32) -> (i32, i32, i32) {
    %c0_i32 = arith.constant 0 : i32
    %c0_i32_0 = arith.constant 0 : i32
    %c0_i32_1 = arith.constant 0 : i32
    return %arg0, %c0_i32, %c0_i32_0 : i32, i32, i32
  }
  func.func @transform_2(%arg0: i32) -> (i32, i32) {
    %c0_i32 = arith.constant 0 : i32
    %c0_i32_0 = arith.constant 0 : i32
    %c0_i32_1 = arith.constant 0 : i32
    return %c0_i32, %c0_i32_0 : i32, i32
  }
  func.func @transform_3(%arg0: i32) -> (i32, i32) {
    %c0_i32 = arith.constant 0 : i32
    %c0_i32_0 = arith.constant 0 : i32
    %c0_i32_1 = arith.constant 0 : i32
    return %c0_i32, %c0_i32_0 : i32, i32
  }
  func.func @transform_4(%arg0: i32) -> (i32, i32) {
    %c0_i32 = arith.constant 0 : i32
    %c0_i32_0 = arith.constant 0 : i32
    %c0_i32_1 = arith.constant 0 : i32
    return %c0_i32, %c0_i32_0 : i32, i32
  }
  func.func @transform_5(%arg0: i32) -> (i32, i32) {
    %c0_i32 = arith.constant 0 : i32
    %c0_i32_0 = arith.constant 0 : i32
    %c0_i32_1 = arith.constant 0 : i32
    return %c0_i32, %c0_i32_0 : i32, i32
  }
  func.func @transform_6(%arg0: i32) -> (i32, i32) {
    %c0_i32 = arith.constant 0 : i32
    %c0_i32_0 = arith.constant 0 : i32
    return %arg0, %c0_i32 : i32, i32
  }
}

</mosaic_0001>

<llo_original>
// kernel: tpu_custom_call.1
$region0: #{tpu_custom_call.1}
  #allocation0 [shape = 'u32[]', space=smem, size = 0x4, offset = 0x4, fixed_abs, tag = 'smem constant byte address 0x4 - core index']
  #allocation1 [shape = 'u32[144,128]{1,0:T(1,128)}', space=vmem, size = 0x12000, scoped, tag = 'internal scratch']
  %s0 = inlined_call_operand.vmem [shape: f32[75,3], index: 0, kind: input, shape index: {}]
  %s1 = inlined_call_operand.vmem [shape: f32[16,75,32], index: 1, kind: input, shape index: {}]
  %s2 = inlined_call_operand.vmem [shape: f32[32,10], index: 2, kind: input, shape index: {}]
  %s3 = inlined_call_operand.vmem [shape: f32[1,10], index: 3, kind: input, shape index: {}]
  %s4 = inlined_call_operand.vmem [shape: f32[32,16], index: 4, kind: input, shape index: {}]
  %s5 = inlined_call_operand.vmem [shape: f32[1,16], index: 5, kind: input, shape index: {}]
  %s6 = inlined_call_operand.hbm [shape: f32[16,128], index: 6, kind: output, shape index: {}]
  %s7 = sld [smem:[#allocation0]]
  $region57: #{tpu_custom_call.1} parent=0
    _
  %s9 = ssub.s32 1, %s7
  %s10 = scalar_select 0, %s9, %s7
  $region1: #{tpu_custom_call.1} parent=0
    #allocation2 [shape = 'u8[8192]{0}', space=vmem, size = 0x2000, scoped, tag = 'output window, operand 0']
    #allocation3 [shape = 's32[2]{0}', space=sflag, size = 0x8, scoped, tag = 'scoped memory for tpu_custom_call.1']
    %11 = vsyncpa [#allocation3], 0
    %s12 = scalar_lea.sflag [#allocation3], 1
    %13 = vsyncpa %s12, 0
    loop: start=0, step=1, limit=4
    $region2: #{tpu_custom_call.1} parent=1 // loop_pre_header
      _
    $region3: #{tpu_custom_call.1} parent=1 // loop_header
      %s15 = sphi 0, %s19
      %p16 = scmp.ge.s32.totalorder %s15, 4
      %s23 = sphi 0, %s23
      %s25 = sphi 0, %s23
      %s26 = sphi 0, %s25
      %s40 = sphi 0, %s26
      %s46 = sphi 0, %s48
      %s49 = sphi 0, %s46
      %s50 = sphi 0, %s49
      %s66 = sphi 0, %s50
      %s70 = sphi 0, %s70
      %s72 = sphi 0, %s70
      %s73 = sphi 0, %s72
      %s87 = sphi 0, %s73
      %s91 = sphi 0, %s91
      %s93 = sphi 0, %s91
      %s94 = sphi 0, %s93
      %s108 = sphi 0, %s94
      %s112 = sphi 0, %s112
      %s114 = sphi 0, %s112
      %s115 = sphi 0, %s114
      %s129 = sphi 0, %s115
      %s133 = sphi 0, %s133
      %s135 = sphi 0, %s133
      %s136 = sphi 0, %s135
      %s150 = sphi 0, %s136
      %s156 = sphi 0, %s158
      %s159 = sphi 0, %s156
      %s160 = sphi 0, %s159
      %s176 = sphi 0, %s160
    $region4: #{tpu_custom_call.1} parent=1 // loop_header_branch
      %18 = sbr.rel (%p16) target = $region8
    $region5: #{tpu_custom_call.1} parent=1 // loop_body
      %s20 = ssub.s32 %s15, 1
      %s21 = ssub.s32 %s15, 2
      %s22 = sadd.s32 %s15, 1
      %s24 = sadd.s32 %s23, 1
      %p27 = scmp.eq.s32.totalorder %s15, 1
      %p28 = scmp.ne.s32.totalorder %s23, %s25
      %p29 = scmp.eq.s32.totalorder %s15, 0
      %p30 = por %p28, %p29
      %p31 = scmp.ne.s32.totalorder %s23, %s25
      %p32 = scmp.eq.s32.totalorder %s20, 1
      %p33 = por %p31, %p32
      %p34 = scmp.ne.s32.totalorder %s25, %s26
      %p35 = scmp.eq.s32.totalorder %s20, 0
      %p36 = por %p34, %p35
      %p37 = scmp.ne.s32.totalorder %s25, %s26
      %p38 = scmp.eq.s32.totalorder %s21, 1
      %p39 = por %p37, %p38
      %p41 = scmp.ne.s32.totalorder %s26, %s40
      %p42 = scmp.eq.s32.totalorder %s21, 0
      %p43 = por %p41, %p42
      %s44 = ssub.s32 %s15, %s22
      %p45 = scmp.eq.s32.totalorder %s44, 0
      %s47 = sadd.s32 %s46, 1
      %s48 = scalar_select %p45, %s46, %s47
      %p51 = pneg %p45
      %p52 = scmp.eq.s32.totalorder %s15, 1
      %p53 = por %p51, %p52
      %p54 = scmp.ne.s32.totalorder %s46, %s49
      %p55 = scmp.eq.s32.totalorder %s15, 0
      %p56 = por %p54, %p55
      %p57 = scmp.ne.s32.totalorder %s46, %s49
      %p58 = scmp.eq.s32.totalorder %s20, 1
      %p59 = por %p57, %p58
      %p60 = scmp.ne.s32.totalorder %s49, %s50
      %p61 = scmp.eq.s32.totalorder %s20, 0
      %p62 = por %p60, %p61
      %p63 = scmp.ne.s32.totalorder %s49, %s50
      %p64 = scmp.eq.s32.totalorder %s21, 1
      %p65 = por %p63, %p64
      %p67 = scmp.ne.s32.totalorder %s50, %s66
      %p68 = scmp.eq.s32.totalorder %s21, 0
      %p69 = por %p67, %p68
      %s71 = sadd.s32 %s70, 1
      %p74 = scmp.eq.s32.totalorder %s15, 1
      %p75 = scmp.ne.s32.totalorder %s70, %s72
      %p76 = scmp.eq.s32.totalorder %s15, 0
      %p77 = por %p75, %p76
      %p78 = scmp.ne.s32.totalorder %s70, %s72
      %p79 = scmp.eq.s32.totalorder %s20, 1
      %p80 = por %p78, %p79
      %p81 = scmp.ne.s32.totalorder %s72, %s73
      %p82 = scmp.eq.s32.totalorder %s20, 0
      %p83 = por %p81, %p82
      %p84 = scmp.ne.s32.totalorder %s72, %s73
      %p85 = scmp.eq.s32.totalorder %s21, 1
      %p86 = por %p84, %p85
      %p88 = scmp.ne.s32.totalorder %s73, %s87
      %p89 = scmp.eq.s32.totalorder %s21, 0
      %p90 = por %p88, %p89
      %s92 = sadd.s32 %s91, 1
      %p95 = scmp.eq.s32.totalorder %s15, 1
      %p96 = scmp.ne.s32.totalorder %s91, %s93
      %p97 = scmp.eq.s32.totalorder %s15, 0
      %p98 = por %p96, %p97
      %p99 = scmp.ne.s32.totalorder %s91, %s93
      %p100 = scmp.eq.s32.totalorder %s20, 1
      %p101 = por %p99, %p100
      %p102 = scmp.ne.s32.totalorder %s93, %s94
      %p103 = scmp.eq.s32.totalorder %s20, 0
      %p104 = por %p102, %p103
      %p105 = scmp.ne.s32.totalorder %s93, %s94
      %p106 = scmp.eq.s32.totalorder %s21, 1
      %p107 = por %p105, %p106
      %p109 = scmp.ne.s32.totalorder %s94, %s108
      %p110 = scmp.eq.s32.totalorder %s21, 0
      %p111 = por %p109, %p110
      %s113 = sadd.s32 %s112, 1
      %p116 = scmp.eq.s32.totalorder %s15, 1
      %p117 = scmp.ne.s32.totalorder %s112, %s114
      %p118 = scmp.eq.s32.totalorder %s15, 0
      %p119 = por %p117, %p118
      %p120 = scmp.ne.s32.totalorder %s112, %s114
      %p121 = scmp.eq.s32.totalorder %s20, 1
      %p122 = por %p120, %p121
      %p123 = scmp.ne.s32.totalorder %s114, %s115
      %p124 = scmp.eq.s32.totalorder %s20, 0
      %p125 = por %p123, %p124
      %p126 = scmp.ne.s32.totalorder %s114, %s115
      %p127 = scmp.eq.s32.totalorder %s21, 1
      %p128 = por %p126, %p127
      %p130 = scmp.ne.s32.totalorder %s115, %s129
      %p131 = scmp.eq.s32.totalorder %s21, 0
      %p132 = por %p130, %p131
      %s134 = sadd.s32 %s133, 1
      %p137 = scmp.eq.s32.totalorder %s15, 1
      %p138 = scmp.ne.s32.totalorder %s133, %s135
      %p139 = scmp.eq.s32.totalorder %s15, 0
      %p140 = por %p138, %p139
      %p141 = scmp.ne.s32.totalorder %s133, %s135
      %p142 = scmp.eq.s32.totalorder %s20, 1
      %p143 = por %p141, %p142
      %p144 = scmp.ne.s32.totalorder %s135, %s136
      %p145 = scmp.eq.s32.totalorder %s20, 0
      %p146 = por %p144, %p145
      %p147 = scmp.ne.s32.totalorder %s135, %s136
      %p148 = scmp.eq.s32.totalorder %s21, 1
      %p149 = por %p147, %p148
      %p151 = scmp.ne.s32.totalorder %s136, %s150
      %p152 = scmp.eq.s32.totalorder %s21, 0
      %p153 = por %p151, %p152
      %s154 = ssub.s32 %s15, %s22
      %p155 = scmp.eq.s32.totalorder %s154, 0
      %s157 = sadd.s32 %s156, 1
      %s158 = scalar_select %p155, %s156, %s157
      %p161 = pneg %p155
      %p162 = scmp.eq.s32.totalorder %s15, 1
      %p163 = por %p161, %p162
      %p164 = scmp.ne.s32.totalorder %s156, %s159
      %p165 = scmp.eq.s32.totalorder %s15, 0
      %p166 = por %p164, %p165
      %p167 = scmp.ne.s32.totalorder %s156, %s159
      %p168 = scmp.eq.s32.totalorder %s20, 1
      %p169 = por %p167, %p168
      %p170 = scmp.ne.s32.totalorder %s159, %s160
      %p171 = scmp.eq.s32.totalorder %s20, 0
      %p172 = por %p170, %p171
      %p173 = scmp.ne.s32.totalorder %s159, %s160
      %p174 = scmp.eq.s32.totalorder %s21, 1
      %p175 = por %p173, %p174
      %p177 = scmp.ne.s32.totalorder %s160, %s176
      %p178 = scmp.eq.s32.totalorder %s21, 0
      %p179 = por %p177, %p178
      %p180 = scmp.le.s32.totalorder 1, %s15
      %p181 = scmp.lt.s32.totalorder %s15, 3
      %p182 = pnand %p180, %p181
      %p183 = pneg %p182
      // Predicated region
      $region9: #{tpu_custom_call.1} parent=5 // pred_check
        _
      $region10: #{tpu_custom_call.1} parent=5 // pred_check_branch
        %185 = sbr.rel (%p182) target = $region12
      $region11: #{tpu_custom_call.1} parent=5 // pred_region
        %s186 = ssub.s32 %s15, 1
        // Predicated region
        $region13: #{tpu_custom_call.1} parent=11 // pred_check
          %p187 = pneg %p36
        $region14: #{tpu_custom_call.1} parent=11 // pred_check_branch
          %189 = sbr.rel (%p187) target = $region16
        $region15: #{tpu_custom_call.1} parent=11 // pred_region
          _
        $region16: #{tpu_custom_call.1} parent=11 // pred_fallthru
          _
        // Predicated region
        $region17: #{tpu_custom_call.1} parent=11 // pred_check
          %p190 = pneg %p83
        $region18: #{tpu_custom_call.1} parent=11 // pred_check_branch
          %192 = sbr.rel (%p190) target = $region20
        $region19: #{tpu_custom_call.1} parent=11 // pred_region
          _
        $region20: #{tpu_custom_call.1} parent=11 // pred_fallthru
          _
        // Predicated region
        $region21: #{tpu_custom_call.1} parent=11 // pred_check
          %p193 = pneg %p104
        $region22: #{tpu_custom_call.1} parent=11 // pred_check_branch
          %195 = sbr.rel (%p193) target = $region24
        $region23: #{tpu_custom_call.1} parent=11 // pred_region
          _
        $region24: #{tpu_custom_call.1} parent=11 // pred_fallthru
          _
        // Predicated region
        $region25: #{tpu_custom_call.1} parent=11 // pred_check
          %p196 = pneg %p125
        $region26: #{tpu_custom_call.1} parent=11 // pred_check_branch
          %198 = sbr.rel (%p196) target = $region28
        $region27: #{tpu_custom_call.1} parent=11 // pred_region
          _
        $region28: #{tpu_custom_call.1} parent=11 // pred_fallthru
          _
        // Predicated region
        $region29: #{tpu_custom_call.1} parent=11 // pred_check
          %p199 = pneg %p146
        $region30: #{tpu_custom_call.1} parent=11 // pred_check_branch
          %201 = sbr.rel (%p199) target = $region32
        $region31: #{tpu_custom_call.1} parent=11 // pred_region
          _
        $region32: #{tpu_custom_call.1} parent=11 // pred_fallthru
          _
      $region12: #{tpu_custom_call.1} parent=5 // pred_fallthru
        _
      %p202 = scmp.lt.s32.totalorder %s15, 2
      // Predicated region
      $region33: #{tpu_custom_call.1} parent=5 // pred_check
        %p203 = pneg %p202
      $region34: #{tpu_custom_call.1} parent=5 // pred_check_branch
        %205 = sbr.rel (%p203) target = $region36
      $region35: #{tpu_custom_call.1} parent=5 // pred_region
        // Predicated region
        $region37: #{tpu_custom_call.1} parent=35 // pred_check
          %p206 = pneg %p56
        $region38: #{tpu_custom_call.1} parent=35 // pred_check_branch
          %208 = sbr.rel (%p206) target = $region40
        $region39: #{tpu_custom_call.1} parent=35 // pred_region
          %s209 = smul.u32 8, %s15
          %p210 = scmp.lt.s32.totalorder %s209, 15
          %s211 = scalar_select %p210, %s209, 15
          %s212 = smul.addr %s211, 10
          %s213 = smul.addr %s212, 8
          %s214 = scalar_lea.vmem %s1, %s213
          %s215 = smul.u32 8, %s15
        $region40: #{tpu_custom_call.1} parent=35 // pred_fallthru
          _
      $region36: #{tpu_custom_call.1} parent=5 // pred_fallthru
        _
      %p216 = scmp.le.s32.totalorder 1, %s15
      %p217 = scmp.lt.s32.totalorder %s15, 3
      %p218 = pnand %p216, %p217
      %p219 = pneg %p218
      // Predicated region
      $region41: #{tpu_custom_call.1} parent=5 // pred_check
        _
      $region42: #{tpu_custom_call.1} parent=5 // pred_check_branch
        %221 = sbr.rel (%p218) target = $region44
      $region43: #{tpu_custom_call.1} parent=5 // pred_region
        %s222 = ssub.s32 %s15, 1
        %p223 = pneg %p36
        %p224 = pneg %p33
        %s225 = smul.u32 8, %s20
        %p226 = scmp.lt.s32.totalorder %s225, 15
        %s227 = scalar_select %p226, %s225, 15
        %s228 = smul.addr %s227, 10
        %s229 = smul.addr %s228, 8
        %s230 = scalar_lea.vmem %s1, %s229
        %p231 = pneg %p62
        %p232 = pneg %p59
        %p233 = pneg %p83
        %p234 = pneg %p80
        %p235 = pneg %p104
        %p236 = pneg %p101
        %p237 = pneg %p125
        %p238 = pneg %p122
        %p239 = pneg %p146
        %p240 = pneg %p143
        %p241 = pneg %p172
        %p242 = pneg %p169
        %s243 = sand.u32 %s159, 1
        %s244 = scalar_lea.sflag [#allocation3], %s243
        %s245 = sand.u32 %s159, 1
        %s246 = smul.addr %s245, 8
        %s247 = scalar_lea.vmem [#allocation2], %s246
        %s248 = smul.u32 8, %s20
        %p249 = scmp.lt.s32.totalorder %s248, 15
        %s250 = scalar_select %p249, %s248, 15
        %s251 = smul.addr %s250, 10
        %s252 = smul.addr %s251, 8
        %s253 = scalar_lea.vmem %s1, %s252
        %s254 = smul.u32 8, %s20
        %v255 = vld [vmem:[%s0] sm:$0xff]
        %v256 = vld [vmem:[%s0 + $0x8] sm:$0xff]
        %v257 = vld [vmem:[%s0 + $0x10] sm:$0xff]
        %v258 = vld [vmem:[%s0 + $0x18] sm:$0xff]
        %v259 = vld [vmem:[%s0 + $0x20] sm:$0xff]
        %v260 = vld [vmem:[%s0 + $0x28] sm:$0xff]
        %v261 = vld [vmem:[%s0 + $0x30] sm:$0xff]
        %v262 = vld [vmem:[%s0 + $0x38] sm:$0xff]
        %v263 = vld [vmem:[%s0 + $0x40] sm:$0xff]
        %v264 = vld [vmem:[%s0 + $0x48] sm:$0x7]
        %vm265 = vcmask 23552
        %v266 = vsel %vm265, %v255, -inf
        %267 = vmax.xlane.f32.xlu0 %v266
        %v268 = vpop.xlane.xlu0 %267
        %v269 = vsel %vm265, %v256, -inf
        %270 = vmax.xlane.f32.xlu0 %v269
        %v271 = vpop.xlane.xlu0 %270
        %v272 = vsel %vm265, %v257, -inf
        %273 = vmax.xlane.f32.xlu0 %v272
        %v274 = vpop.xlane.xlu0 %273
        %v275 = vsel %vm265, %v258, -inf
        %276 = vmax.xlane.f32.xlu0 %v275
        %v277 = vpop.xlane.xlu0 %276
        %v278 = vsel %vm265, %v259, -inf
        %279 = vmax.xlane.f32.xlu0 %v278
        %v280 = vpop.xlane.xlu0 %279
        %v281 = vsel %vm265, %v260, -inf
        %282 = vmax.xlane.f32.xlu0 %v281
        %v283 = vpop.xlane.xlu0 %282
        %v284 = vsel %vm265, %v261, -inf
        %285 = vmax.xlane.f32.xlu0 %v284
        %v286 = vpop.xlane.xlu0 %285
        %v287 = vsel %vm265, %v262, -inf
        %288 = vmax.xlane.f32.xlu0 %v287
        %v289 = vpop.xlane.xlu0 %288
        %v290 = vsel %vm265, %v263, -inf
        %291 = vmax.xlane.f32.xlu0 %v290
        %v292 = vpop.xlane.xlu0 %291
        %vm293 = vcmask 18432
        %v294 = vsel %vm293, %v264, -inf
        %295 = vmax.xlane.f32.xlu0 %v294
        %v296 = vpop.xlane.xlu0 %295
        %v297 = vsub.f32 %v255, %v268
        %v298 = vsub.f32 %v256, %v271
        %v299 = vsub.f32 %v257, %v274
        %v300 = vsub.f32 %v258, %v277
        %v301 = vsub.f32 %v259, %v280
        %v302 = vsub.f32 %v260, %v283
        %v303 = vsub.f32 %v261, %v286
        %v304 = vsub.f32 %v262, %v289
        %v305 = vsub.f32 %v263, %v292
        %v306 = vsub.f32 %v264, %v296
        %v307 = vmul.f32 %v297, 1.442695
        %v308 = vpow.pop %v307
        %v309 = vmul.f32 %v298, 1.442695
        %v310 = vpow.pop %v309
        %v311 = vmul.f32 %v299, 1.442695
        %v312 = vpow.pop %v311
        %v313 = vmul.f32 %v300, 1.442695
        %v314 = vpow.pop %v313
        %v315 = vmul.f32 %v301, 1.442695
        %v316 = vpow.pop %v315
        %v317 = vmul.f32 %v302, 1.442695
        %v318 = vpow.pop %v317
        %v319 = vmul.f32 %v303, 1.442695
        %v320 = vpow.pop %v319
        %v321 = vmul.f32 %v304, 1.442695
        %v322 = vpow.pop %v321
        %v323 = vmul.f32 %v305, 1.442695
        %v324 = vpow.pop %v323
        %v325 = vmul.f32 %v306, 1.442695
        %v326 = vpow.pop %v325
        %v327 = vsel %vm265, %v308, 0.0
        %328 = vadd.xlane.f32.xlu0 %v327
        %v329 = vpop.xlane.xlu0 %328
        %v330 = vsel %vm265, %v310, 0.0
        %331 = vadd.xlane.f32.xlu0 %v330
        %v332 = vpop.xlane.xlu0 %331
        %v333 = vsel %vm265, %v312, 0.0
        %334 = vadd.xlane.f32.xlu0 %v333
        %v335 = vpop.xlane.xlu0 %334
        %v336 = vsel %vm265, %v314, 0.0
        %337 = vadd.xlane.f32.xlu0 %v336
        %v338 = vpop.xlane.xlu0 %337
        %v339 = vsel %vm265, %v316, 0.0
        %340 = vadd.xlane.f32.xlu0 %v339
        %v341 = vpop.xlane.xlu0 %340
        %v342 = vsel %vm265, %v318, 0.0
        %343 = vadd.xlane.f32.xlu0 %v342
        %v344 = vpop.xlane.xlu0 %343
        %v345 = vsel %vm265, %v320, 0.0
        %346 = vadd.xlane.f32.xlu0 %v345
        %v347 = vpop.xlane.xlu0 %346
        %v348 = vsel %vm265, %v322, 0.0
        %349 = vadd.xlane.f32.xlu0 %v348
        %v350 = vpop.xlane.xlu0 %349
        %v351 = vsel %vm265, %v324, 0.0
        %352 = vadd.xlane.f32.xlu0 %v351
        %v353 = vpop.xlane.xlu0 %352
        %v354 = vsel %vm293, %v326, 0.0
        %355 = vadd.xlane.f32.xlu0 %v354
        %v356 = vpop.xlane.xlu0 %355
        %v357 = vrcp.pop %v329
        %v358 = vmul.f32 %v308, %v357
        %v359 = vrcp.pop %v332
        %v360 = vmul.f32 %v310, %v359
        %v361 = vrcp.pop %v335
        %v362 = vmul.f32 %v312, %v361
        %v363 = vrcp.pop %v338
        %v364 = vmul.f32 %v314, %v363
        %v365 = vrcp.pop %v341
        %v366 = vmul.f32 %v316, %v365
        %v367 = vrcp.pop %v344
        %v368 = vmul.f32 %v318, %v367
        %v369 = vrcp.pop %v347
        %v370 = vmul.f32 %v320, %v369
        %v371 = vrcp.pop %v350
        %v372 = vmul.f32 %v322, %v371
        %v373 = vrcp.pop %v353
        %v374 = vmul.f32 %v324, %v373
        %v375 = vrcp.pop %v356
        %v376 = vmul.f32 %v326, %v375
        %v377 = vld [vmem:[%s253] sm:$0xff]
        %v378 = vld [vmem:[%s253 + $0x8] sm:$0xff]
        %v379 = vld [vmem:[%s253 + $0x10] sm:$0xff]
        %v380 = vld [vmem:[%s253 + $0x18] sm:$0xff]
        %v381 = vld [vmem:[%s253 + $0x20] sm:$0xff]
        %v382 = vld [vmem:[%s253 + $0x28] sm:$0xff]
        %v383 = vld [vmem:[%s253 + $0x30] sm:$0xff]
        %v384 = vld [vmem:[%s253 + $0x38] sm:$0xff]
        %v385 = vld [vmem:[%s253 + $0x40] sm:$0xff]
        %v386 = vld [vmem:[%s253 + $0x48] sm:$0x7]
        %v387 = vld [vmem:[%s253 + $0x50] sm:$0xff]
        %v388 = vld [vmem:[%s253 + $0x58] sm:$0xff]
        %v389 = vld [vmem:[%s253 + $0x60] sm:$0xff]
        %v390 = vld [vmem:[%s253 + $0x68] sm:$0xff]
        %v391 = vld [vmem:[%s253 + $0x70] sm:$0xff]
        %v392 = vld [vmem:[%s253 + $0x78] sm:$0xff]
        %v393 = vld [vmem:[%s253 + $0x80] sm:$0xff]
        %v394 = vld [vmem:[%s253 + $0x88] sm:$0xff]
        %v395 = vld [vmem:[%s253 + $0x90] sm:$0xff]
        %v396 = vld [vmem:[%s253 + $0x98] sm:$0x7]
        %v397 = vld [vmem:[%s253 + $0xa0] sm:$0xff]
        %v398 = vld [vmem:[%s253 + $0xa8] sm:$0xff]
        %v399 = vld [vmem:[%s253 + $0xb0] sm:$0xff]
        %v400 = vld [vmem:[%s253 + $0xb8] sm:$0xff]
        %v401 = vld [vmem:[%s253 + $0xc0] sm:$0xff]
        %v402 = vld [vmem:[%s253 + $0xc8] sm:$0xff]
        %v403 = vld [vmem:[%s253 + $0xd0] sm:$0xff]
        %v404 = vld [vmem:[%s253 + $0xd8] sm:$0xff]
        %v405 = vld [vmem:[%s253 + $0xe0] sm:$0xff]
        %v406 = vld [vmem:[%s253 + $0xe8] sm:$0x7]
        %v407 = vld [vmem:[%s253 + $0xf0] sm:$0xff]
        %v408 = vld [vmem:[%s253 + $0xf8] sm:$0xff]
        %v409 = vld [vmem:[%s253 + $0x100] sm:$0xff]
        %v410 = vld [vmem:[%s253 + $0x108] sm:$0xff]
        %v411 = vld [vmem:[%s253 + $0x110] sm:$0xff]
        %v412 = vld [vmem:[%s253 + $0x118] sm:$0xff]
        %v413 = vld [vmem:[%s253 + $0x120] sm:$0xff]
        %v414 = vld [vmem:[%s253 + $0x128] sm:$0xff]
        %v415 = vld [vmem:[%s253 + $0x130] sm:$0xff]
        %v416 = vld [vmem:[%s253 + $0x138] sm:$0x7]
        %v417 = vld [vmem:[%s253 + $0x140] sm:$0xff]
        %v418 = vld [vmem:[%s253 + $0x148] sm:$0xff]
        %v419 = vld [vmem:[%s253 + $0x150] sm:$0xff]
        %v420 = vld [vmem:[%s253 + $0x158] sm:$0xff]
        %v421 = vld [vmem:[%s253 + $0x160] sm:$0xff]
        %v422 = vld [vmem:[%s253 + $0x168] sm:$0xff]
        %v423 = vld [vmem:[%s253 + $0x170] sm:$0xff]
        %v424 = vld [vmem:[%s253 + $0x178] sm:$0xff]
        %v425 = vld [vmem:[%s253 + $0x180] sm:$0xff]
        %v426 = vld [vmem:[%s253 + $0x188] sm:$0x7]
        %v427 = vld [vmem:[%s253 + $0x190] sm:$0xff]
        %v428 = vld [vmem:[%s253 + $0x198] sm:$0xff]
        %v429 = vld [vmem:[%s253 + $0x1a0] sm:$0xff]
        %v430 = vld [vmem:[%s253 + $0x1a8] sm:$0xff]
        %v431 = vld [vmem:[%s253 + $0x1b0] sm:$0xff]
        %v432 = vld [vmem:[%s253 + $0x1b8] sm:$0xff]
        %v433 = vld [vmem:[%s253 + $0x1c0] sm:$0xff]
        %v434 = vld [vmem:[%s253 + $0x1c8] sm:$0xff]
        %v435 = vld [vmem:[%s253 + $0x1d0] sm:$0xff]
        %v436 = vld [vmem:[%s253 + $0x1d8] sm:$0x7]
        %v437 = vld [vmem:[%s253 + $0x1e0] sm:$0xff]
        %v438 = vld [vmem:[%s253 + $0x1e8] sm:$0xff]
        %v439 = vld [vmem:[%s253 + $0x1f0] sm:$0xff]
        %v440 = vld [vmem:[%s253 + $0x1f8] sm:$0xff]
        %v441 = vld [vmem:[%s253 + $0x200] sm:$0xff]
        %v442 = vld [vmem:[%s253 + $0x208] sm:$0xff]
        %v443 = vld [vmem:[%s253 + $0x210] sm:$0xff]
        %v444 = vld [vmem:[%s253 + $0x218] sm:$0xff]
        %v445 = vld [vmem:[%s253 + $0x220] sm:$0xff]
        %v446 = vld [vmem:[%s253 + $0x228] sm:$0x7]
        %v447 = vld [vmem:[%s253 + $0x230] sm:$0xff]
        %v448 = vld [vmem:[%s253 + $0x238] sm:$0xff]
        %v449 = vld [vmem:[%s253 + $0x240] sm:$0xff]
        %v450 = vld [vmem:[%s253 + $0x248] sm:$0xff]
        %v451 = vld [vmem:[%s253 + $0x250] sm:$0xff]
        %v452 = vld [vmem:[%s253 + $0x258] sm:$0xff]
        %v453 = vld [vmem:[%s253 + $0x260] sm:$0xff]
        %v454 = vld [vmem:[%s253 + $0x268] sm:$0xff]
        %v455 = vld [vmem:[%s253 + $0x270] sm:$0xff]
        %v456 = vld [vmem:[%s253 + $0x278] sm:$0x7]
        %vm457 = vcmask 7168
        %v458 = vsel %vm457, %v358, 0.0
        %v459 = vsel %vm457, %v360, 0.0
        %v460 = vadd.f32 %v458, %v459
        %v461 = vsel %vm457, %v362, 0.0
        %v462 = vadd.f32 %v460, %v461
        %v463 = vsel %vm457, %v364, 0.0
        %v464 = vadd.f32 %v462, %v463
        %v465 = vsel %vm457, %v366, 0.0
        %v466 = vadd.f32 %v464, %v465
        %v467 = vsel %vm457, %v368, 0.0
        %v468 = vadd.f32 %v466, %v467
        %v469 = vsel %vm457, %v370, 0.0
        %v470 = vadd.f32 %v468, %v469
        %v471 = vsel %vm457, %v372, 0.0
        %v472 = vadd.f32 %v470, %v471
        %v473 = vsel %vm457, %v374, 0.0
        %v474 = vadd.f32 %v472, %v473
        %vm475 = vcmask 2048
        %v476 = vsel %vm475, %v376, 0.0
        %v477 = vadd.f32 %v474, %v476
        %v478 = vrot.slane %v477, 4
        %v479 = vadd.f32 %v477, %v478
        %v480 = vrot.slane %v479, 2
        %v481 = vadd.f32 %v479, %v480
        %v482 = vrot.slane %v481, 1
        %v483 = vadd.f32 %v481, %v482
        %v484 = vrcp.pop %v483
        %v485 = vmul.f32 %v358, %v484
        %v486 = vmul.f32 %v360, %v484
        %v487 = vmul.f32 %v362, %v484
        %v488 = vmul.f32 %v364, %v484
        %v489 = vmul.f32 %v366, %v484
        %v490 = vmul.f32 %v368, %v484
        %v491 = vmul.f32 %v370, %v484
        %v492 = vmul.f32 %v372, %v484
        %v493 = vmul.f32 %v374, %v484
        %v494 = vmul.f32 %v376, %v484
        %496 = vset.pattern.permute.xlu0 0
        %497 = vperm.xlu0 %496, %v485
        %v498 = vpop.permute.xlu0 %497
        %501 = vset.pattern.permute.xlu0 0
        %502 = vperm.xlu0 %501, %v486
        %v503 = vpop.permute.xlu0 %502
        %506 = vset.pattern.permute.xlu0 0
        %507 = vperm.xlu0 %506, %v487
        %v508 = vpop.permute.xlu0 %507
        %511 = vset.pattern.permute.xlu0 0
        %512 = vperm.xlu0 %511, %v488
        %v513 = vpop.permute.xlu0 %512
        %516 = vset.pattern.permute.xlu0 0
        %517 = vperm.xlu0 %516, %v489
        %v518 = vpop.permute.xlu0 %517
        %521 = vset.pattern.permute.xlu0 0
        %522 = vperm.xlu0 %521, %v490
        %v523 = vpop.permute.xlu0 %522
        %526 = vset.pattern.permute.xlu0 0
        %527 = vperm.xlu0 %526, %v491
        %v528 = vpop.permute.xlu0 %527
        %531 = vset.pattern.permute.xlu0 0
        %532 = vperm.xlu0 %531, %v492
        %v533 = vpop.permute.xlu0 %532
        %536 = vset.pattern.permute.xlu0 0
        %537 = vperm.xlu0 %536, %v493
        %v538 = vpop.permute.xlu0 %537
        %541 = vset.pattern.permute.xlu0 0
        %542 = vperm.xlu0 %541, %v494
        %v543 = vpop.permute.xlu0 %542
        %v545 = vmul.f32 %v498, %v377
        %v546 = vmul.f32 %v503, %v378
        %v547 = vmul.f32 %v508, %v379
        %v548 = vmul.f32 %v513, %v380
        %v549 = vmul.f32 %v518, %v381
        %v550 = vmul.f32 %v523, %v382
        %v551 = vmul.f32 %v528, %v383
        %v552 = vmul.f32 %v533, %v384
        %v553 = vmul.f32 %v538, %v385
        %v554 = vmul.f32 %v543, %v386
        %v555 = vmul.f32 %v498, %v387
        %v556 = vmul.f32 %v503, %v388
        %v557 = vmul.f32 %v508, %v389
        %v558 = vmul.f32 %v513, %v390
        %v559 = vmul.f32 %v518, %v391
        %v560 = vmul.f32 %v523, %v392
        %v561 = vmul.f32 %v528, %v393
        %v562 = vmul.f32 %v533, %v394
        %v563 = vmul.f32 %v538, %v395
        %v564 = vmul.f32 %v543, %v396
        %v565 = vmul.f32 %v498, %v397
        %v566 = vmul.f32 %v503, %v398
        %v567 = vmul.f32 %v508, %v399
        %v568 = vmul.f32 %v513, %v400
        %v569 = vmul.f32 %v518, %v401
        %v570 = vmul.f32 %v523, %v402
        %v571 = vmul.f32 %v528, %v403
        %v572 = vmul.f32 %v533, %v404
        %v573 = vmul.f32 %v538, %v405
        %v574 = vmul.f32 %v543, %v406
        %v575 = vmul.f32 %v498, %v407
        %v576 = vmul.f32 %v503, %v408
        %v577 = vmul.f32 %v508, %v409
        %v578 = vmul.f32 %v513, %v410
        %v579 = vmul.f32 %v518, %v411
        %v580 = vmul.f32 %v523, %v412
        %v581 = vmul.f32 %v528, %v413
        %v582 = vmul.f32 %v533, %v414
        %v583 = vmul.f32 %v538, %v415
        %v584 = vmul.f32 %v543, %v416
        %v585 = vmul.f32 %v498, %v417
        %v586 = vmul.f32 %v503, %v418
        %v587 = vmul.f32 %v508, %v419
        %v588 = vmul.f32 %v513, %v420
        %v589 = vmul.f32 %v518, %v421
        %v590 = vmul.f32 %v523, %v422
        %v591 = vmul.f32 %v528, %v423
        %v592 = vmul.f32 %v533, %v424
        %v593 = vmul.f32 %v538, %v425
        %v594 = vmul.f32 %v543, %v426
        %v595 = vmul.f32 %v498, %v427
        %v596 = vmul.f32 %v503, %v428
        %v597 = vmul.f32 %v508, %v429
        %v598 = vmul.f32 %v513, %v430
        %v599 = vmul.f32 %v518, %v431
        %v600 = vmul.f32 %v523, %v432
        %v601 = vmul.f32 %v528, %v433
        %v602 = vmul.f32 %v533, %v434
        %v603 = vmul.f32 %v538, %v435
        %v604 = vmul.f32 %v543, %v436
        %v605 = vmul.f32 %v498, %v437
        %v606 = vmul.f32 %v503, %v438
        %v607 = vmul.f32 %v508, %v439
        %v608 = vmul.f32 %v513, %v440
        %v609 = vmul.f32 %v518, %v441
        %v610 = vmul.f32 %v523, %v442
        %v611 = vmul.f32 %v528, %v443
        %v612 = vmul.f32 %v533, %v444
        %v613 = vmul.f32 %v538, %v445
        %v614 = vmul.f32 %v543, %v446
        %v615 = vmul.f32 %v498, %v447
        %v616 = vmul.f32 %v503, %v448
        %v617 = vmul.f32 %v508, %v449
        %v618 = vmul.f32 %v513, %v450
        %v619 = vmul.f32 %v518, %v451
        %v620 = vmul.f32 %v523, %v452
        %v621 = vmul.f32 %v528, %v453
        %v622 = vmul.f32 %v533, %v454
        %v623 = vmul.f32 %v538, %v455
        %v624 = vmul.f32 %v543, %v456
        %vm625 = vcmask 261120
        %v626 = vsel %vm625, %v545, 0.0
        %v627 = vsel %vm625, %v546, 0.0
        %v628 = vadd.f32 %v626, %v627
        %v629 = vsel %vm625, %v547, 0.0
        %v630 = vadd.f32 %v628, %v629
        %v631 = vsel %vm625, %v548, 0.0
        %v632 = vadd.f32 %v630, %v631
        %v633 = vsel %vm625, %v549, 0.0
        %v634 = vadd.f32 %v632, %v633
        %v635 = vsel %vm625, %v550, 0.0
        %v636 = vadd.f32 %v634, %v635
        %v637 = vsel %vm625, %v551, 0.0
        %v638 = vadd.f32 %v636, %v637
        %v639 = vsel %vm625, %v552, 0.0
        %v640 = vadd.f32 %v638, %v639
        %v641 = vsel %vm625, %v553, 0.0
        %v642 = vadd.f32 %v640, %v641
        %vm643 = vcmask 256000
        %v644 = vsel %vm643, %v554, 0.0
        %v645 = vadd.f32 %v642, %v644
        %v646 = vrot.slane %v645, 4
        %v647 = vadd.f32 %v645, %v646
        %v648 = vrot.slane %v647, 2
        %v649 = vadd.f32 %v647, %v648
        %v650 = vrot.slane %v649, 1
        %v651 = vadd.f32 %v649, %v650
        %v652 = vsel %vm625, %v555, 0.0
        %v653 = vsel %vm625, %v556, 0.0
        %v654 = vadd.f32 %v652, %v653
        %v655 = vsel %vm625, %v557, 0.0
        %v656 = vadd.f32 %v654, %v655
        %v657 = vsel %vm625, %v558, 0.0
        %v658 = vadd.f32 %v656, %v657
        %v659 = vsel %vm625, %v559, 0.0
        %v660 = vadd.f32 %v658, %v659
        %v661 = vsel %vm625, %v560, 0.0
        %v662 = vadd.f32 %v660, %v661
        %v663 = vsel %vm625, %v561, 0.0
        %v664 = vadd.f32 %v662, %v663
        %v665 = vsel %vm625, %v562, 0.0
        %v666 = vadd.f32 %v664, %v665
        %v667 = vsel %vm625, %v563, 0.0
        %v668 = vadd.f32 %v666, %v667
        %v669 = vsel %vm643, %v564, 0.0
        %v670 = vadd.f32 %v668, %v669
        %v671 = vrot.slane %v670, 4
        %v672 = vadd.f32 %v670, %v671
        %v673 = vrot.slane %v672, 2
        %v674 = vadd.f32 %v672, %v673
        %v675 = vrot.slane %v674, 1
        %v676 = vadd.f32 %v674, %v675
        %v677 = vsel %vm625, %v565, 0.0
        %v678 = vsel %vm625, %v566, 0.0
        %v679 = vadd.f32 %v677, %v678
        %v680 = vsel %vm625, %v567, 0.0
        %v681 = vadd.f32 %v679, %v680
        %v682 = vsel %vm625, %v568, 0.0
        %v683 = vadd.f32 %v681, %v682
        %v684 = vsel %vm625, %v569, 0.0
        %v685 = vadd.f32 %v683, %v684
        %v686 = vsel %vm625, %v570, 0.0
        %v687 = vadd.f32 %v685, %v686
        %v688 = vsel %vm625, %v571, 0.0
        %v689 = vadd.f32 %v687, %v688
        %v690 = vsel %vm625, %v572, 0.0
        %v691 = vadd.f32 %v689, %v690
        %v692 = vsel %vm625, %v573, 0.0
        %v693 = vadd.f32 %v691, %v692
        %v694 = vsel %vm643, %v574, 0.0
        %v695 = vadd.f32 %v693, %v694
        %v696 = vrot.slane %v695, 4
        %v697 = vadd.f32 %v695, %v696
        %v698 = vrot.slane %v697, 2
        %v699 = vadd.f32 %v697, %v698
        %v700 = vrot.slane %v699, 1
        %v701 = vadd.f32 %v699, %v700
        %v702 = vsel %vm625, %v575, 0.0
        %v703 = vsel %vm625, %v576, 0.0
        %v704 = vadd.f32 %v702, %v703
        %v705 = vsel %vm625, %v577, 0.0
        %v706 = vadd.f32 %v704, %v705
        %v707 = vsel %vm625, %v578, 0.0
        %v708 = vadd.f32 %v706, %v707
        %v709 = vsel %vm625, %v579, 0.0
        %v710 = vadd.f32 %v708, %v709
        %v711 = vsel %vm625, %v580, 0.0
        %v712 = vadd.f32 %v710, %v711
        %v713 = vsel %vm625, %v581, 0.0
        %v714 = vadd.f32 %v712, %v713
        %v715 = vsel %vm625, %v582, 0.0
        %v716 = vadd.f32 %v714, %v715
        %v717 = vsel %vm625, %v583, 0.0
        %v718 = vadd.f32 %v716, %v717
        %v719 = vsel %vm643, %v584, 0.0
        %v720 = vadd.f32 %v718, %v719
        %v721 = vrot.slane %v720, 4
        %v722 = vadd.f32 %v720, %v721
        %v723 = vrot.slane %v722, 2
        %v724 = vadd.f32 %v722, %v723
        %v725 = vrot.slane %v724, 1
        %v726 = vadd.f32 %v724, %v725
        %v727 = vsel %vm625, %v585, 0.0
        %v728 = vsel %vm625, %v586, 0.0
        %v729 = vadd.f32 %v727, %v728
        %v730 = vsel %vm625, %v587, 0.0
        %v731 = vadd.f32 %v729, %v730
        %v732 = vsel %vm625, %v588, 0.0
        %v733 = vadd.f32 %v731, %v732
        %v734 = vsel %vm625, %v589, 0.0
        %v735 = vadd.f32 %v733, %v734
        %v736 = vsel %vm625, %v590, 0.0
        %v737 = vadd.f32 %v735, %v736
        %v738 = vsel %vm625, %v591, 0.0
        %v739 = vadd.f32 %v737, %v738
        %v740 = vsel %vm625, %v592, 0.0
        %v741 = vadd.f32 %v739, %v740
        %v742 = vsel %vm625, %v593, 0.0
        %v743 = vadd.f32 %v741, %v742
        %v744 = vsel %vm643, %v594, 0.0
        %v745 = vadd.f32 %v743, %v744
        %v746 = vrot.slane %v745, 4
        %v747 = vadd.f32 %v745, %v746
        %v748 = vrot.slane %v747, 2
        %v749 = vadd.f32 %v747, %v748
        %v750 = vrot.slane %v749, 1
        %v751 = vadd.f32 %v749, %v750
        %v752 = vsel %vm625, %v595, 0.0
        %v753 = vsel %vm625, %v596, 0.0
        %v754 = vadd.f32 %v752, %v753
        %v755 = vsel %vm625, %v597, 0.0
        %v756 = vadd.f32 %v754, %v755
        %v757 = vsel %vm625, %v598, 0.0
        %v758 = vadd.f32 %v756, %v757
        %v759 = vsel %vm625, %v599, 0.0
        %v760 = vadd.f32 %v758, %v759
        %v761 = vsel %vm625, %v600, 0.0
        %v762 = vadd.f32 %v760, %v761
        %v763 = vsel %vm625, %v601, 0.0
        %v764 = vadd.f32 %v762, %v763
        %v765 = vsel %vm625, %v602, 0.0
        %v766 = vadd.f32 %v764, %v765
        %v767 = vsel %vm625, %v603, 0.0
        %v768 = vadd.f32 %v766, %v767
        %v769 = vsel %vm643, %v604, 0.0
        %v770 = vadd.f32 %v768, %v769
        %v771 = vrot.slane %v770, 4
        %v772 = vadd.f32 %v770, %v771
        %v773 = vrot.slane %v772, 2
        %v774 = vadd.f32 %v772, %v773
        %v775 = vrot.slane %v774, 1
        %v776 = vadd.f32 %v774, %v775
        %v777 = vsel %vm625, %v605, 0.0
        %v778 = vsel %vm625, %v606, 0.0
        %v779 = vadd.f32 %v777, %v778
        %v780 = vsel %vm625, %v607, 0.0
        %v781 = vadd.f32 %v779, %v780
        %v782 = vsel %vm625, %v608, 0.0
        %v783 = vadd.f32 %v781, %v782
        %v784 = vsel %vm625, %v609, 0.0
        %v785 = vadd.f32 %v783, %v784
        %v786 = vsel %vm625, %v610, 0.0
        %v787 = vadd.f32 %v785, %v786
        %v788 = vsel %vm625, %v611, 0.0
        %v789 = vadd.f32 %v787, %v788
        %v790 = vsel %vm625, %v612, 0.0
        %v791 = vadd.f32 %v789, %v790
        %v792 = vsel %vm625, %v613, 0.0
        %v793 = vadd.f32 %v791, %v792
        %v794 = vsel %vm643, %v614, 0.0
        %v795 = vadd.f32 %v793, %v794
        %v796 = vrot.slane %v795, 4
        %v797 = vadd.f32 %v795, %v796
        %v798 = vrot.slane %v797, 2
        %v799 = vadd.f32 %v797, %v798
        %v800 = vrot.slane %v799, 1
        %v801 = vadd.f32 %v799, %v800
        %v802 = vsel %vm625, %v615, 0.0
        %v803 = vsel %vm625, %v616, 0.0
        %v804 = vadd.f32 %v802, %v803
        %v805 = vsel %vm625, %v617, 0.0
        %v806 = vadd.f32 %v804, %v805
        %v807 = vsel %vm625, %v618, 0.0
        %v808 = vadd.f32 %v806, %v807
        %v809 = vsel %vm625, %v619, 0.0
        %v810 = vadd.f32 %v808, %v809
        %v811 = vsel %vm625, %v620, 0.0
        %v812 = vadd.f32 %v810, %v811
        %v813 = vsel %vm625, %v621, 0.0
        %v814 = vadd.f32 %v812, %v813
        %v815 = vsel %vm625, %v622, 0.0
        %v816 = vadd.f32 %v814, %v815
        %v817 = vsel %vm625, %v623, 0.0
        %v818 = vadd.f32 %v816, %v817
        %v819 = vsel %vm643, %v624, 0.0
        %v820 = vadd.f32 %v818, %v819
        %v821 = vrot.slane %v820, 4
        %v822 = vadd.f32 %v820, %v821
        %v823 = vrot.slane %v822, 2
        %v824 = vadd.f32 %v822, %v823
        %v825 = vrot.slane %v824, 1
        %v826 = vadd.f32 %v824, %v825
        %v827 = vld [vmem:[%s2] sm:$0xff]
        %v828 = vld [vmem:[%s2 + $0x8] sm:$0xff]
        %v829 = vld [vmem:[%s2 + $0x10] sm:$0xff]
        %v830 = vld [vmem:[%s2 + $0x18] sm:$0xff]
        %v831 = vld [vmem:[%s3] sm:$0x1]
        %v833 = vlaneseq
        %v834 = vshrl.u32 %v833, 7
        %v835 = vsub.s32 0, %v834
        %v836 = vrot.slane %v831, %v835
        %vm846 = vcmask 1041409
        %v847 = vsel %vm846, %v676, %v651
        %vm848 = vcmask 1042434
        %v849 = vsel %vm848, %v701, %v847
        %vm850 = vcmask 1043459
        %v851 = vsel %vm850, %v726, %v849
        %vm852 = vcmask 1044484
        %v853 = vsel %vm852, %v751, %v851
        %vm854 = vcmask 1045509
        %v855 = vsel %vm854, %v776, %v853
        %vm856 = vcmask 1046534
        %v857 = vsel %vm856, %v801, %v855
        %vm858 = vcmask 1047559
        %v859 = vsel %vm858, %v826, %v857
        %v860 = vsel %vm625, %v859, 0
        %862 = vmatprep.subr.mxu0 0.0
        %863 = vmatpush1.msra.mxu0 %v827
        %864 = vmatprep.subr.mxu0 0.0
        %865 = vmatpush1.msra.mxu0 %v828
        %866 = vmatprep.subr.mxu0 0.0
        %867 = vmatpush1.msra.mxu0 %v829
        %868 = vmatprep.subr.mxu0 0.0
        %869 = vmatpush1.msra.mxu0 %v830
        %870 = vmatprep.subr.mxu0 0.0
        %871 = vmatpush1.msra.mxu0 0.0
        %872 = vmatprep.subr.mxu0 0.0
        %873 = vmatpush1.msra.mxu0 0.0
        %874 = vmatprep.subr.mxu0 0.0
        %875 = vmatpush1.msra.mxu0 0.0
        %876 = vmatprep.subr.mxu0 0.0
        %877 = vmatpush1.msra.mxu0 0.0
        %878 = vmatprep.subr.mxu0 0.0
        %879 = vmatpush1.msra.mxu0 0.0
        %880 = vmatprep.subr.mxu0 0.0
        %881 = vmatpush1.msra.mxu0 0.0
        %882 = vmatprep.subr.mxu0 0.0
        %883 = vmatpush1.msra.mxu0 0.0
        %884 = vmatprep.subr.mxu0 0.0
        %885 = vmatpush1.msra.mxu0 0.0
        %886 = vmatprep.subr.mxu0 0.0
        %887 = vmatpush1.msra.mxu0 0.0
        %888 = vmatprep.subr.mxu0 0.0
        %889 = vmatpush1.msra.mxu0 0.0
        %890 = vmatprep.subr.mxu0 0.0
        %891 = vmatpush1.msra.mxu0 0.0
        %892 = vmatprep.subr.mxu0 0.0
        %893 = vmatpush1.msra.mxu0 0.0
        %894 = vmatprep.subr.mxu0 0.0
        %895 = vmatpush1.msra.mxu0 0.0
        %896 = vmatprep.subr.mxu0 0.0
        %897 = vmatpush1.msra.mxu0 0.0
        %898 = vmatprep.subr.mxu0 0.0
        %899 = vmatpush1.msra.mxu0 0.0
        %900 = vmatprep.subr.mxu0 0.0
        %901 = vmatpush1.msra.mxu0 0.0
        %902 = vmatprep.subr.mxu0 0.0
        %903 = vmatpush1.msra.mxu0 0.0
        %904 = vmatprep.subr.mxu0 0.0
        %905 = vmatpush1.msra.mxu0 0.0
        %906 = vmatprep.subr.mxu0 0.0
        %907 = vmatpush1.msra.mxu0 0.0
        %908 = vmatprep.subr.mxu0 0.0
        %909 = vmatpush1.msra.mxu0 0.0
        %910 = vmatprep.subr.mxu0 0.0
        %911 = vmatpush1.msra.mxu0 0.0
        %912 = vmatprep.subr.mxu0 0.0
        %913 = vmatpush1.msra.mxu0 0.0
        %914 = vmatprep.subr.mxu0 0.0
        %915 = vmatpush1.msra.mxu0 0.0
        %916 = vmatprep.subr.mxu0 0.0
        %917 = vmatpush1.msra.mxu0 0.0
        %918 = vmatprep.subr.mxu0 0.0
        %919 = vmatpush1.msra.mxu0 0.0
        %920 = vmatprep.subr.mxu0 0.0
        %921 = vmatpush1.msra.mxu0 0.0
        %922 = vmatprep.subr.mxu0 0.0
        %923 = vmatpush1.msra.mxu0 0.0
        %924 = vmatprep.subr.mxu0 0.0
        %925 = vmatpush1.msra.mxu0 0.0
        %926 = vmatprep.mubr.f32.mxu0 0.0
        %927 = vmatmul.mubr.f32.gmra.mrb[0].mxu0 %v860
        %v928 = vpop.f32.mrb[0].mxu0
        %v929 = vadd.f32 %v836, %v928
        %v930 = vpop.f32.mrb[0].mxu0
        %931 = vdwg.mxu0
        %vm932 = vcmask 80896
        %v933 = vsel %vm932, %v929, -inf
        %934 = vmax.xlane.f32.xlu0 %v933
        %v935 = vpop.xlane.xlu0 %934
        %v936 = vsub.f32 %v929, %v935
        %v937 = vmul.f32 %v936, 1.442695
        %v938 = vpow.pop %v937
        %v939 = vsel %vm932, %v938, 0.0
        %940 = vadd.xlane.f32.xlu0 %v939
        %v941 = vpop.xlane.xlu0 %940
        %v942 = vlog2.pop %v941
        %v943 = vmul.f32 %v942, 0.6931472
        %v944 = vsub.f32 %v936, %v943
        %vm945 = vcmask 15368
        %v946 = vsel %vm945, %v358, 0.0
        %v947 = vsel %vm945, %v360, 0.0
        %v948 = vadd.f32 %v946, %v947
        %v949 = vsel %vm945, %v362, 0.0
        %v950 = vadd.f32 %v948, %v949
        %v951 = vsel %vm945, %v364, 0.0
        %v952 = vadd.f32 %v950, %v951
        %v953 = vsel %vm945, %v366, 0.0
        %v954 = vadd.f32 %v952, %v953
        %v955 = vsel %vm945, %v368, 0.0
        %v956 = vadd.f32 %v954, %v955
        %v957 = vsel %vm945, %v370, 0.0
        %v958 = vadd.f32 %v956, %v957
        %v959 = vsel %vm945, %v372, 0.0
        %v960 = vadd.f32 %v958, %v959
        %v961 = vsel %vm945, %v374, 0.0
        %v962 = vadd.f32 %v960, %v961
        %vm963 = vcmask 10248
        %v964 = vsel %vm963, %v376, 0.0
        %v965 = vadd.f32 %v962, %v964
        %v966 = vrot.slane %v965, 4
        %v967 = vadd.f32 %v965, %v966
        %v968 = vrot.slane %v967, 2
        %v969 = vadd.f32 %v967, %v968
        %v970 = vrot.slane %v969, 1
        %v971 = vadd.f32 %v969, %v970
        %v972 = vrcp.pop %v971
        %v973 = vmul.f32 %v358, %v972
        %v974 = vmul.f32 %v360, %v972
        %v975 = vmul.f32 %v362, %v972
        %v976 = vmul.f32 %v364, %v972
        %v977 = vmul.f32 %v366, %v972
        %v978 = vmul.f32 %v368, %v972
        %v979 = vmul.f32 %v370, %v972
        %v980 = vmul.f32 %v372, %v972
        %v981 = vmul.f32 %v374, %v972
        %v982 = vmul.f32 %v376, %v972
        %984 = vset.pattern.permute.xlu0 1
        %985 = vperm.xlu0 %984, %v973
        %v986 = vpop.permute.xlu0 %985
        %989 = vset.pattern.permute.xlu0 1
        %990 = vperm.xlu0 %989, %v974
        %v991 = vpop.permute.xlu0 %990
        %994 = vset.pattern.permute.xlu0 1
        %995 = vperm.xlu0 %994, %v975
        %v996 = vpop.permute.xlu0 %995
        %999 = vset.pattern.permute.xlu0 1
        %1000 = vperm.xlu0 %999, %v976
        %v1001 = vpop.permute.xlu0 %1000
        %1004 = vset.pattern.permute.xlu0 1
        %1005 = vperm.xlu0 %1004, %v977
        %v1006 = vpop.permute.xlu0 %1005
        %1009 = vset.pattern.permute.xlu0 1
        %1010 = vperm.xlu0 %1009, %v978
        %v1011 = vpop.permute.xlu0 %1010
        %1014 = vset.pattern.permute.xlu0 1
        %1015 = vperm.xlu0 %1014, %v979
        %v1016 = vpop.permute.xlu0 %1015
        %1019 = vset.pattern.permute.xlu0 1
        %1020 = vperm.xlu0 %1019, %v980
        %v1021 = vpop.permute.xlu0 %1020
        %1024 = vset.pattern.permute.xlu0 1
        %1025 = vperm.xlu0 %1024, %v981
        %v1026 = vpop.permute.xlu0 %1025
        %1029 = vset.pattern.permute.xlu0 1
        %1030 = vperm.xlu0 %1029, %v982
        %v1031 = vpop.permute.xlu0 %1030
        %v1033 = vmul.f32 %v986, %v377
        %v1034 = vmul.f32 %v991, %v378
        %v1035 = vmul.f32 %v996, %v379
        %v1036 = vmul.f32 %v1001, %v380
        %v1037 = vmul.f32 %v1006, %v381
        %v1038 = vmul.f32 %v1011, %v382
        %v1039 = vmul.f32 %v1016, %v383
        %v1040 = vmul.f32 %v1021, %v384
        %v1041 = vmul.f32 %v1026, %v385
        %v1042 = vmul.f32 %v1031, %v386
        %v1043 = vmul.f32 %v986, %v387
        %v1044 = vmul.f32 %v991, %v388
        %v1045 = vmul.f32 %v996, %v389
        %v1046 = vmul.f32 %v1001, %v390
        %v1047 = vmul.f32 %v1006, %v391
        %v1048 = vmul.f32 %v1011, %v392
        %v1049 = vmul.f32 %v1016, %v393
        %v1050 = vmul.f32 %v1021, %v394
        %v1051 = vmul.f32 %v1026, %v395
        %v1052 = vmul.f32 %v1031, %v396
        %v1053 = vmul.f32 %v986, %v397
        %v1054 = vmul.f32 %v991, %v398
        %v1055 = vmul.f32 %v996, %v399
        %v1056 = vmul.f32 %v1001, %v400
        %v1057 = vmul.f32 %v1006, %v401
        %v1058 = vmul.f32 %v1011, %v402
        %v1059 = vmul.f32 %v1016, %v403
        %v1060 = vmul.f32 %v1021, %v404
        %v1061 = vmul.f32 %v1026, %v405
        %v1062 = vmul.f32 %v1031, %v406
        %v1063 = vmul.f32 %v986, %v407
        %v1064 = vmul.f32 %v991, %v408
        %v1065 = vmul.f32 %v996, %v409
        %v1066 = vmul.f32 %v1001, %v410
        %v1067 = vmul.f32 %v1006, %v411
        %v1068 = vmul.f32 %v1011, %v412
        %v1069 = vmul.f32 %v1016, %v413
        %v1070 = vmul.f32 %v1021, %v414
        %v1071 = vmul.f32 %v1026, %v415
        %v1072 = vmul.f32 %v1031, %v416
        %v1073 = vmul.f32 %v986, %v417
        %v1074 = vmul.f32 %v991, %v418
        %v1075 = vmul.f32 %v996, %v419
        %v1076 = vmul.f32 %v1001, %v420
        %v1077 = vmul.f32 %v1006, %v421
        %v1078 = vmul.f32 %v1011, %v422
        %v1079 = vmul.f32 %v1016, %v423
        %v1080 = vmul.f32 %v1021, %v424
        %v1081 = vmul.f32 %v1026, %v425
        %v1082 = vmul.f32 %v1031, %v426
        %v1083 = vmul.f32 %v986, %v427
        %v1084 = vmul.f32 %v991, %v428
        %v1085 = vmul.f32 %v996, %v429
        %v1086 = vmul.f32 %v1001, %v430
        %v1087 = vmul.f32 %v1006, %v431
        %v1088 = vmul.f32 %v1011, %v432
        %v1089 = vmul.f32 %v1016, %v433
        %v1090 = vmul.f32 %v1021, %v434
        %v1091 = vmul.f32 %v1026, %v435
        %v1092 = vmul.f32 %v1031, %v436
        %v1093 = vmul.f32 %v986, %v437
        %v1094 = vmul.f32 %v991, %v438
        %v1095 = vmul.f32 %v996, %v439
        %v1096 = vmul.f32 %v1001, %v440
        %v1097 = vmul.f32 %v1006, %v441
        %v1098 = vmul.f32 %v1011, %v442
        %v1099 = vmul.f32 %v1016, %v443
        %v1100 = vmul.f32 %v1021, %v444
        %v1101 = vmul.f32 %v1026, %v445
        %v1102 = vmul.f32 %v1031, %v446
        %v1103 = vmul.f32 %v986, %v447
        %v1104 = vmul.f32 %v991, %v448
        %v1105 = vmul.f32 %v996, %v449
        %v1106 = vmul.f32 %v1001, %v450
        %v1107 = vmul.f32 %v1006, %v451
        %v1108 = vmul.f32 %v1011, %v452
        %v1109 = vmul.f32 %v1016, %v453
        %v1110 = vmul.f32 %v1021, %v454
        %v1111 = vmul.f32 %v1026, %v455
        %v1112 = vmul.f32 %v1031, %v456
        %v1113 = vsel %vm625, %v1033, 0.0
        %v1114 = vsel %vm625, %v1034, 0.0
        %v1115 = vadd.f32 %v1113, %v1114
        %v1116 = vsel %vm625, %v1035, 0.0
        %v1117 = vadd.f32 %v1115, %v1116
        %v1118 = vsel %vm625, %v1036, 0.0
        %v1119 = vadd.f32 %v1117, %v1118
        %v1120 = vsel %vm625, %v1037, 0.0
        %v1121 = vadd.f32 %v1119, %v1120
        %v1122 = vsel %vm625, %v1038, 0.0
        %v1123 = vadd.f32 %v1121, %v1122
        %v1124 = vsel %vm625, %v1039, 0.0
        %v1125 = vadd.f32 %v1123, %v1124
        %v1126 = vsel %vm625, %v1040, 0.0
        %v1127 = vadd.f32 %v1125, %v1126
        %v1128 = vsel %vm625, %v1041, 0.0
        %v1129 = vadd.f32 %v1127, %v1128
        %v1130 = vsel %vm643, %v1042, 0.0
        %v1131 = vadd.f32 %v1129, %v1130
        %v1132 = vrot.slane %v1131, 4
        %v1133 = vadd.f32 %v1131, %v1132
        %v1134 = vrot.slane %v1133, 2
        %v1135 = vadd.f32 %v1133, %v1134
        %v1136 = vrot.slane %v1135, 1
        %v1137 = vadd.f32 %v1135, %v1136
        %v1138 = vsel %vm625, %v1043, 0.0
        %v1139 = vsel %vm625, %v1044, 0.0
        %v1140 = vadd.f32 %v1138, %v1139
        %v1141 = vsel %vm625, %v1045, 0.0
        %v1142 = vadd.f32 %v1140, %v1141
        %v1143 = vsel %vm625, %v1046, 0.0
        %v1144 = vadd.f32 %v1142, %v1143
        %v1145 = vsel %vm625, %v1047, 0.0
        %v1146 = vadd.f32 %v1144, %v1145
        %v1147 = vsel %vm625, %v1048, 0.0
        %v1148 = vadd.f32 %v1146, %v1147
        %v1149 = vsel %vm625, %v1049, 0.0
        %v1150 = vadd.f32 %v1148, %v1149
        %v1151 = vsel %vm625, %v1050, 0.0
        %v1152 = vadd.f32 %v1150, %v1151
        %v1153 = vsel %vm625, %v1051, 0.0
        %v1154 = vadd.f32 %v1152, %v1153
        %v1155 = vsel %vm643, %v1052, 0.0
        %v1156 = vadd.f32 %v1154, %v1155
        %v1157 = vrot.slane %v1156, 4
        %v1158 = vadd.f32 %v1156, %v1157
        %v1159 = vrot.slane %v1158, 2
        %v1160 = vadd.f32 %v1158, %v1159
        %v1161 = vrot.slane %v1160, 1
        %v1162 = vadd.f32 %v1160, %v1161
        %v1163 = vsel %vm625, %v1053, 0.0
        %v1164 = vsel %vm625, %v1054, 0.0
        %v1165 = vadd.f32 %v1163, %v1164
        %v1166 = vsel %vm625, %v1055, 0.0
        %v1167 = vadd.f32 %v1165, %v1166
        %v1168 = vsel %vm625, %v1056, 0.0
        %v1169 = vadd.f32 %v1167, %v1168
        %v1170 = vsel %vm625, %v1057, 0.0
        %v1171 = vadd.f32 %v1169, %v1170
        %v1172 = vsel %vm625, %v1058, 0.0
        %v1173 = vadd.f32 %v1171, %v1172
        %v1174 = vsel %vm625, %v1059, 0.0
        %v1175 = vadd.f32 %v1173, %v1174
        %v1176 = vsel %vm625, %v1060, 0.0
        %v1177 = vadd.f32 %v1175, %v1176
        %v1178 = vsel %vm625, %v1061, 0.0
        %v1179 = vadd.f32 %v1177, %v1178
        %v1180 = vsel %vm643, %v1062, 0.0
        %v1181 = vadd.f32 %v1179, %v1180
        %v1182 = vrot.slane %v1181, 4
        %v1183 = vadd.f32 %v1181, %v1182
        %v1184 = vrot.slane %v1183, 2
        %v1185 = vadd.f32 %v1183, %v1184
        %v1186 = vrot.slane %v1185, 1
        %v1187 = vadd.f32 %v1185, %v1186
        %v1188 = vsel %vm625, %v1063, 0.0
        %v1189 = vsel %vm625, %v1064, 0.0
        %v1190 = vadd.f32 %v1188, %v1189
        %v1191 = vsel %vm625, %v1065, 0.0
        %v1192 = vadd.f32 %v1190, %v1191
        %v1193 = vsel %vm625, %v1066, 0.0
        %v1194 = vadd.f32 %v1192, %v1193
        %v1195 = vsel %vm625, %v1067, 0.0
        %v1196 = vadd.f32 %v1194, %v1195
        %v1197 = vsel %vm625, %v1068, 0.0
        %v1198 = vadd.f32 %v1196, %v1197
        %v1199 = vsel %vm625, %v1069, 0.0
        %v1200 = vadd.f32 %v1198, %v1199
        %v1201 = vsel %vm625, %v1070, 0.0
        %v1202 = vadd.f32 %v1200, %v1201
        %v1203 = vsel %vm625, %v1071, 0.0
        %v1204 = vadd.f32 %v1202, %v1203
        %v1205 = vsel %vm643, %v1072, 0.0
        %v1206 = vadd.f32 %v1204, %v1205
        %v1207 = vrot.slane %v1206, 4
        %v1208 = vadd.f32 %v1206, %v1207
        %v1209 = vrot.slane %v1208, 2
        %v1210 = vadd.f32 %v1208, %v1209
        %v1211 = vrot.slane %v1210, 1
        %v1212 = vadd.f32 %v1210, %v1211
        %v1213 = vsel %vm625, %v1073, 0.0
        %v1214 = vsel %vm625, %v1074, 0.0
        %v1215 = vadd.f32 %v1213, %v1214
        %v1216 = vsel %vm625, %v1075, 0.0
        %v1217 = vadd.f32 %v1215, %v1216
        %v1218 = vsel %vm625, %v1076, 0.0
        %v1219 = vadd.f32 %v1217, %v1218
        %v1220 = vsel %vm625, %v1077, 0.0
        %v1221 = vadd.f32 %v1219, %v1220
        %v1222 = vsel %vm625, %v1078, 0.0
        %v1223 = vadd.f32 %v1221, %v1222
        %v1224 = vsel %vm625, %v1079, 0.0
        %v1225 = vadd.f32 %v1223, %v1224
        %v1226 = vsel %vm625, %v1080, 0.0
        %v1227 = vadd.f32 %v1225, %v1226
        %v1228 = vsel %vm625, %v1081, 0.0
        %v1229 = vadd.f32 %v1227, %v1228
        %v1230 = vsel %vm643, %v1082, 0.0
        %v1231 = vadd.f32 %v1229, %v1230
        %v1232 = vrot.slane %v1231, 4
        %v1233 = vadd.f32 %v1231, %v1232
        %v1234 = vrot.slane %v1233, 2
        %v1235 = vadd.f32 %v1233, %v1234
        %v1236 = vrot.slane %v1235, 1
        %v1237 = vadd.f32 %v1235, %v1236
        %v1238 = vsel %vm625, %v1083, 0.0
        %v1239 = vsel %vm625, %v1084, 0.0
        %v1240 = vadd.f32 %v1238, %v1239
        %v1241 = vsel %vm625, %v1085, 0.0
        %v1242 = vadd.f32 %v1240, %v1241
        %v1243 = vsel %vm625, %v1086, 0.0
        %v1244 = vadd.f32 %v1242, %v1243
        %v1245 = vsel %vm625, %v1087, 0.0
        %v1246 = vadd.f32 %v1244, %v1245
        %v1247 = vsel %vm625, %v1088, 0.0
        %v1248 = vadd.f32 %v1246, %v1247
        %v1249 = vsel %vm625, %v1089, 0.0
        %v1250 = vadd.f32 %v1248, %v1249
        %v1251 = vsel %vm625, %v1090, 0.0
        %v1252 = vadd.f32 %v1250, %v1251
        %v1253 = vsel %vm625, %v1091, 0.0
        %v1254 = vadd.f32 %v1252, %v1253
        %v1255 = vsel %vm643, %v1092, 0.0
        %v1256 = vadd.f32 %v1254, %v1255
        %v1257 = vrot.slane %v1256, 4
        %v1258 = vadd.f32 %v1256, %v1257
        %v1259 = vrot.slane %v1258, 2
        %v1260 = vadd.f32 %v1258, %v1259
        %v1261 = vrot.slane %v1260, 1
        %v1262 = vadd.f32 %v1260, %v1261
        %v1263 = vsel %vm625, %v1093, 0.0
        %v1264 = vsel %vm625, %v1094, 0.0
        %v1265 = vadd.f32 %v1263, %v1264
        %v1266 = vsel %vm625, %v1095, 0.0
        %v1267 = vadd.f32 %v1265, %v1266
        %v1268 = vsel %vm625, %v1096, 0.0
        %v1269 = vadd.f32 %v1267, %v1268
        %v1270 = vsel %vm625, %v1097, 0.0
        %v1271 = vadd.f32 %v1269, %v1270
        %v1272 = vsel %vm625, %v1098, 0.0
        %v1273 = vadd.f32 %v1271, %v1272
        %v1274 = vsel %vm625, %v1099, 0.0
        %v1275 = vadd.f32 %v1273, %v1274
        %v1276 = vsel %vm625, %v1100, 0.0
        %v1277 = vadd.f32 %v1275, %v1276
        %v1278 = vsel %vm625, %v1101, 0.0
        %v1279 = vadd.f32 %v1277, %v1278
        %v1280 = vsel %vm643, %v1102, 0.0
        %v1281 = vadd.f32 %v1279, %v1280
        %v1282 = vrot.slane %v1281, 4
        %v1283 = vadd.f32 %v1281, %v1282
        %v1284 = vrot.slane %v1283, 2
        %v1285 = vadd.f32 %v1283, %v1284
        %v1286 = vrot.slane %v1285, 1
        %v1287 = vadd.f32 %v1285, %v1286
        %v1288 = vsel %vm625, %v1103, 0.0
        %v1289 = vsel %vm625, %v1104, 0.0
        %v1290 = vadd.f32 %v1288, %v1289
        %v1291 = vsel %vm625, %v1105, 0.0
        %v1292 = vadd.f32 %v1290, %v1291
        %v1293 = vsel %vm625, %v1106, 0.0
        %v1294 = vadd.f32 %v1292, %v1293
        %v1295 = vsel %vm625, %v1107, 0.0
        %v1296 = vadd.f32 %v1294, %v1295
        %v1297 = vsel %vm625, %v1108, 0.0
        %v1298 = vadd.f32 %v1296, %v1297
        %v1299 = vsel %vm625, %v1109, 0.0
        %v1300 = vadd.f32 %v1298, %v1299
        %v1301 = vsel %vm625, %v1110, 0.0
        %v1302 = vadd.f32 %v1300, %v1301
        %v1303 = vsel %vm625, %v1111, 0.0
        %v1304 = vadd.f32 %v1302, %v1303
        %v1305 = vsel %vm643, %v1112, 0.0
        %v1306 = vadd.f32 %v1304, %v1305
        %v1307 = vrot.slane %v1306, 4
        %v1308 = vadd.f32 %v1306, %v1307
        %v1309 = vrot.slane %v1308, 2
        %v1310 = vadd.f32 %v1308, %v1309
        %v1311 = vrot.slane %v1310, 1
        %v1312 = vadd.f32 %v1310, %v1311
        %v1313 = vld [vmem:[%s4] sm:$0xff]
        %v1314 = vld [vmem:[%s4 + $0x8] sm:$0xff]
        %v1315 = vld [vmem:[%s4 + $0x10] sm:$0xff]
        %v1316 = vld [vmem:[%s4 + $0x18] sm:$0xff]
        %v1317 = vld [vmem:[%s5] sm:$0x1]
        %v1319 = vlaneseq
        %v1320 = vshrl.u32 %v1319, 7
        %v1321 = vsub.s32 0, %v1320
        %v1322 = vrot.slane %v1317, %v1321
        %v1332 = vsel %vm846, %v1162, %v1137
        %v1333 = vsel %vm848, %v1187, %v1332
        %v1334 = vsel %vm850, %v1212, %v1333
        %v1335 = vsel %vm852, %v1237, %v1334
        %v1336 = vsel %vm854, %v1262, %v1335
        %v1337 = vsel %vm856, %v1287, %v1336
        %v1338 = vsel %vm858, %v1312, %v1337
        %v1339 = vsel %vm625, %v1338, 0
        %1341 = vmatprep.subr.mxu0 0.0
        %1342 = vmatpush1.msra.mxu0 %v1313
        %1343 = vmatprep.subr.mxu0 0.0
        %1344 = vmatpush1.msra.mxu0 %v1314
        %1345 = vmatprep.subr.mxu0 0.0
        %1346 = vmatpush1.msra.mxu0 %v1315
        %1347 = vmatprep.subr.mxu0 0.0
        %1348 = vmatpush1.msra.mxu0 %v1316
        %1349 = vmatprep.subr.mxu0 0.0
        %1350 = vmatpush1.msra.mxu0 0.0
        %1351 = vmatprep.subr.mxu0 0.0
        %1352 = vmatpush1.msra.mxu0 0.0
        %1353 = vmatprep.subr.mxu0 0.0
        %1354 = vmatpush1.msra.mxu0 0.0
        %1355 = vmatprep.subr.mxu0 0.0
        %1356 = vmatpush1.msra.mxu0 0.0
        %1357 = vmatprep.subr.mxu0 0.0
        %1358 = vmatpush1.msra.mxu0 0.0
        %1359 = vmatprep.subr.mxu0 0.0
        %1360 = vmatpush1.msra.mxu0 0.0
        %1361 = vmatprep.subr.mxu0 0.0
        %1362 = vmatpush1.msra.mxu0 0.0
        %1363 = vmatprep.subr.mxu0 0.0
        %1364 = vmatpush1.msra.mxu0 0.0
        %1365 = vmatprep.subr.mxu0 0.0
        %1366 = vmatpush1.msra.mxu0 0.0
        %1367 = vmatprep.subr.mxu0 0.0
        %1368 = vmatpush1.msra.mxu0 0.0
        %1369 = vmatprep.subr.mxu0 0.0
        %1370 = vmatpush1.msra.mxu0 0.0
        %1371 = vmatprep.subr.mxu0 0.0
        %1372 = vmatpush1.msra.mxu0 0.0
        %1373 = vmatprep.subr.mxu0 0.0
        %1374 = vmatpush1.msra.mxu0 0.0
        %1375 = vmatprep.subr.mxu0 0.0
        %1376 = vmatpush1.msra.mxu0 0.0
        %1377 = vmatprep.subr.mxu0 0.0
        %1378 = vmatpush1.msra.mxu0 0.0
        %1379 = vmatprep.subr.mxu0 0.0
        %1380 = vmatpush1.msra.mxu0 0.0
        %1381 = vmatprep.subr.mxu0 0.0
        %1382 = vmatpush1.msra.mxu0 0.0
        %1383 = vmatprep.subr.mxu0 0.0
        %1384 = vmatpush1.msra.mxu0 0.0
        %1385 = vmatprep.subr.mxu0 0.0
        %1386 = vmatpush1.msra.mxu0 0.0
        %1387 = vmatprep.subr.mxu0 0.0
        %1388 = vmatpush1.msra.mxu0 0.0
        %1389 = vmatprep.subr.mxu0 0.0
        %1390 = vmatpush1.msra.mxu0 0.0
        %1391 = vmatprep.subr.mxu0 0.0
        %1392 = vmatpush1.msra.mxu0 0.0
        %1393 = vmatprep.subr.mxu0 0.0
        %1394 = vmatpush1.msra.mxu0 0.0
        %1395 = vmatprep.subr.mxu0 0.0
        %1396 = vmatpush1.msra.mxu0 0.0
        %1397 = vmatprep.subr.mxu0 0.0
        %1398 = vmatpush1.msra.mxu0 0.0
        %1399 = vmatprep.subr.mxu0 0.0
        %1400 = vmatpush1.msra.mxu0 0.0
        %1401 = vmatprep.subr.mxu0 0.0
        %1402 = vmatpush1.msra.mxu0 0.0
        %1403 = vmatprep.subr.mxu0 0.0
        %1404 = vmatpush1.msra.mxu0 0.0
        %1405 = vmatprep.mubr.f32.mxu0 0.0
        %1406 = vmatmul.mubr.f32.gmra.mrb[0].mxu0 %v1339
        %v1407 = vpop.f32.mrb[0].mxu0
        %v1408 = vadd.f32 %v1322, %v1407
        %v1409 = vpop.f32.mrb[0].mxu0
        %1410 = vdwg.mxu0
        %vm1411 = vcmask 130048
        %v1412 = vsel %vm1411, %v1408, -inf
        %1413 = vmax.xlane.f32.xlu0 %v1412
        %v1414 = vpop.xlane.xlu0 %1413
        %v1415 = vsub.f32 %v1408, %v1414
        %v1416 = vmul.f32 %v1415, 1.442695
        %v1417 = vpow.pop %v1416
        %v1418 = vsel %vm1411, %v1417, 0.0
        %1419 = vadd.xlane.f32.xlu0 %v1418
        %v1420 = vpop.xlane.xlu0 %1419
        %v1421 = vlog2.pop %v1420
        %v1422 = vmul.f32 %v1421, 0.6931472
        %v1423 = vsub.f32 %v1415, %v1422
        %1425 = vrot.lane.b32.xlu0 %v1423, 10
        %v1426 = vpop.permute.xlu0 %1425
        %v1428 = vsel %vm932, %v944, %v1426
        %vm1429 = vcmask 211968
        %v1430 = vsel %vm1429, %v1428, 0.0
        %1431 = vst [vmem:[%s247] sm:$0xff] %v1430
        %s1432 = sand.u32 %s159, 1
        %s1433 = scalar_lea.sflag [#allocation3], %s1432
        %s1434 = sand.u32 %s159, 1
        %s1435 = smul.addr %s1434, 8
        %s1436 = scalar_lea.vmem [#allocation2], %s1435
        // Predicated region
        $region45: #{tpu_custom_call.1} parent=43 // pred_check
          %p1437 = pneg %p169
        $region46: #{tpu_custom_call.1} parent=43 // pred_check_branch
          %1439 = sbr.rel (%p1437) target = $region48
        $region47: #{tpu_custom_call.1} parent=43 // pred_region
          %s1441 = ssub.s32 128, 128
          %1442 = vsyncadd %s1433, %s1441
          %s1443 = smul.addr %s20, 128
          %s1444 = scalar_lea.hbm %s6, %s1443
          %s1446 = sshll.u32 %s1436, 4
          %s1447 = int_to_ptr.vmem [resolvable:$true] %s1446
          %1449 = dma.vmem_to_hbm [thread:$0]  %s1447, 128, %s1444, %s1433
        $region48: #{tpu_custom_call.1} parent=43 // pred_fallthru
          _
      $region44: #{tpu_custom_call.1} parent=5 // pred_fallthru
        _
      %p1450 = scmp.le.s32.totalorder 2, %s15
      // Predicated region
      $region49: #{tpu_custom_call.1} parent=5 // pred_check
        %p1451 = pneg %p1450
      $region50: #{tpu_custom_call.1} parent=5 // pred_check_branch
        %1453 = sbr.rel (%p1451) target = $region52
      $region51: #{tpu_custom_call.1} parent=5 // pred_region
        %s1454 = ssub.s32 %s15, 2
        // Predicated region
        $region53: #{tpu_custom_call.1} parent=51 // pred_check
          %p1455 = pneg %p175
        $region54: #{tpu_custom_call.1} parent=51 // pred_check_branch
          %1457 = sbr.rel (%p1455) target = $region56
        $region55: #{tpu_custom_call.1} parent=51 // pred_region
          %s1458 = sand.u32 %s160, 1
          %s1459 = scalar_lea.sflag [#allocation3], %s1458
          %s1460 = sand.u32 %s160, 1
          %s1461 = smul.addr %s1460, 8
          %s1462 = scalar_lea.vmem [#allocation2], %s1461
          %1463 = dma.done %s1459, 128
        $region56: #{tpu_custom_call.1} parent=51 // pred_fallthru
          _
      $region52: #{tpu_custom_call.1} parent=5 // pred_fallthru
        _
    $region6: #{tpu_custom_call.1} parent=1 // loop_footer
      %s19 = sadd.s32 1, %s15
    $region7: #{tpu_custom_call.1} parent=1 // loop_footer_branch
      %14 = sbr.rel target = $region3
    $region8: #{tpu_custom_call.1} parent=1 // loop_exit
      _
    %1464 = vsyncpa [#allocation3], 1
    %s1465 = scalar_lea.sflag [#allocation3], 1
    %1466 = vsyncpa %s1465, 1

</llo_original>
